<compile_context>
chip_gen: v7x
topology: tpu7x:2x2x1
jax: 0.10.0
libtpu: 0.0.40
codegen_flags: <defaults>
</compile_context>

<pallas_src>
import math
import numpy as np
import jax
import jax.numpy as jnp
from jax.experimental import pallas as pl
from jax.experimental.pallas import tpu as pltpu

_NEG_INF = -1e9  # large finite negative instead of -inf (bf16 / padding safe)


# ----------------------------------------------------------------------------
# shared math
# ----------------------------------------------------------------------------
def _layernorm(v, w, b, eps=1e-12):
    # TF-style LayerNorm (eps inside the sqrt), f32, biased variance.
    # NOTE: this module's LayerNorm subclass uses eps=1e-12 (not 1e-5).
    u = jnp.mean(v, axis=-1, keepdims=True)
    s = jnp.mean((v - u) ** 2, axis=-1, keepdims=True)
    return w * ((v - u) / jnp.sqrt(s + eps)) + b


# ----------------------------------------------------------------------------
# Pallas kernels
# ----------------------------------------------------------------------------
def make_resblock_kernel(TB, L, W, H):
    """One residual attention block applied to TB whole batch elements
    (R = TB*L rows of the (B*L, W) slab).  The layer index is the innermost
    grid axis; activations persist in the VMEM scratch accumulator."""
    D = W // H
    scale = 1.0 / math.sqrt(D)
    R = TB * L
    f32, bf16 = jnp.float32, jnp.bfloat16

    def kernel(mask_ref, x_ref,
               ln1w_ref, ln1b_ref,
               wqkv_ref, bqkv_ref,          # (W, 3W) bf16, (1, 3W) f32
               wo_ref, bo_ref,              # (W, W)  bf16, (1, W)  f32
               ln2w_ref, ln2b_ref,
               wfc_ref, bfc_ref,            # (W, 4W) bf16, (1, 4W) f32
               wpr_ref, bpr_ref,            # (4W, W) bf16, (1, W)  f32
               o_ref, x_acc):
        layer = pl.program_id(1)

        @pl.when(layer == 0)
        def _():
            x_acc[...] = x_ref[...].astype(f32)

        x = x_acc[...]                                   # (R, W) f32
        mask = mask_ref[...]                             # (L, L) f32

        # ---- x = x + attn(ln_1(x)) ---------------------------------------
        h = _layernorm(x, ln1w_ref[...], ln1b_ref[...]).astype(bf16)
        qkv = jnp.dot(h, wqkv_ref[...],
                      preferred_element_type=f32) + bqkv_ref[...]   # (R, 3W)
        q3 = (qkv[:, 0 * W:1 * W] * scale).astype(bf16).reshape(TB, L, W)
        k3 = qkv[:, 1 * W:2 * W].astype(bf16).reshape(TB, L, W)
        v3 = qkv[:, 2 * W:3 * W].astype(bf16).reshape(TB, L, W)

        # Batched over batch elements; static unroll over heads only.
        # TODO(synk): head slices are lane-dim slices at D-multiples; a fully
        # head-batched dot_general layout would remove per-head relayouts.
        ctx = []
        for hd in range(H):
            c = hd * D
            s = jnp.einsum('bqd,bkd->bqk',
                           q3[..., c:c + D], k3[..., c:c + D],
                           preferred_element_type=f32) + mask[None, :, :]
            m = jnp.max(s, axis=-1, keepdims=True)
            e = jnp.exp(s - m)                                       # f32
            p = e * pl.reciprocal(jnp.sum(e, axis=-1, keepdims=True),
                                  approx=True)
            ctx.append(jnp.einsum('bqk,bkd->bqd',
                                  p.astype(bf16), v3[..., c:c + D],
                                  preferred_element_type=f32))       # (TB,L,D)
        attn = jnp.concatenate(ctx, axis=-1).reshape(R, W)           # (R, W)
        # single full-K out-projection over concatenated heads
        x = x + jnp.dot(attn.astype(bf16), wo_ref[...],
                        preferred_element_type=f32) + bo_ref[...]

        # ---- x = x + mlp(ln_2(x)) ------------------------------------------
        h2 = _layernorm(x, ln2w_ref[...], ln2b_ref[...]).astype(bf16)
        f = jnp.dot(h2, wfc_ref[...],
                    preferred_element_type=f32) + bfc_ref[...]       # (R, 4W)
        f = (f * jax.nn.sigmoid(1.702 * f)).astype(bf16)             # QuickGELU
        x = x + jnp.dot(f, wpr_ref[...],
                        preferred_element_type=f32) + bpr_ref[...]

        x_acc[...] = x

        @pl.when(layer == pl.num_programs(1) - 1)
        def _():
            o_ref[...] = x.astype(o_ref.dtype)

    return kernel


def ln_final_kernel(x_ref, w_ref, b_ref, o_ref):
    x = x_ref[...].astype(jnp.float32)
    o_ref[...] = _layernorm(x, w_ref[...], b_ref[...]).astype(o_ref.dtype)


# ----------------------------------------------------------------------------
# Wrappers (pallas_call)
# ----------------------------------------------------------------------------
def _pick_tb(B, L_pad, target_rows=512):
    tb = 1
    for cand in range(1, B + 1):
        if B % cand == 0 and cand * L_pad <= max(target_rows, L_pad):
            tb = cand
    return tb


def transformer_pallas(text, params, B, L, W, H, tb=None):
    layers = len(params['blocks'])
    L_pad = ((L + 7) // 8) * 8
    TB = _pick_tb(B, L_pad) if tb is None else tb
    assert B % TB == 0
    R = TB * L_pad
    f32, bf16 = jnp.float32, jnp.bfloat16

    # --- glue: token embedding + positional embedding + padding ------------
    x = params['token_embedding'][text] + params['positional_embedding'][None]
    x = x.astype(f32)
    if L_pad != L:
        x = jnp.pad(x, ((0, 0), (0, L_pad - L), (0, 0)))
    x2 = x.reshape(B * L_pad, W)

    # causal mask (triu(1)) + padded-column mask, finite large negative
    idx = jnp.arange(L_pad)
    mask = jnp.where((idx[None, :] > idx[:, None]) | (idx[None, :] >= L),
                     _NEG_INF, 0.0).astype(f32)

    # --- stack per-layer weights along a leading "layer" axis --------------
    blocks = params['blocks']

    def stk(fn, dtype=f32):
        return jnp.stack([fn(b) for b in blocks]).astype(dtype)

    ln1w = stk(lambda b: b['ln1_w'].reshape(1, W))
    ln1b = stk(lambda b: b['ln1_b'].reshape(1, W))
    wqkv = stk(lambda b: b['w_qkv'].T, bf16)             # (layers, W, 3W)
    bqkv = stk(lambda b: b['b_qkv'].reshape(1, 3 * W))
    wo = stk(lambda b: b['w_o'].T, bf16)                 # (layers, W, W)
    bo = stk(lambda b: b['b_o'].reshape(1, W))
    ln2w = stk(lambda b: b['ln2_w'].reshape(1, W))
    ln2b = stk(lambda b: b['ln2_b'].reshape(1, W))
    wfc = stk(lambda b: b['w_fc'].T, bf16)               # (layers, W, 4W)
    bfc = stk(lambda b: b['b_fc'].reshape(1, 4 * W))
    wpr = stk(lambda b: b['w_pr'].T, bf16)               # (layers, 4W, W)
    bpr = stk(lambda b: b['b_pr'].reshape(1, W))

    def wspec(*shape):
        # stacked per-layer tensor: squeeze the layer axis, select layer l
        return pl.BlockSpec((None,) + shape, lambda i, l: (l, 0, 0))

    in_specs = [
        pl.BlockSpec((L_pad, L_pad), lambda i, l: (0, 0)),    # mask
        pl.BlockSpec((R, W), lambda i, l: (i, 0)),            # x (1 fetch/tile)
        wspec(1, W), wspec(1, W),                             # ln1 w, b
        wspec(W, 3 * W), wspec(1, 3 * W),                     # qkv proj
        wspec(W, W), wspec(1, W),                             # out proj
        wspec(1, W), wspec(1, W),                             # ln2 w, b
        wspec(W, 4 * W), wspec(1, 4 * W),                     # mlp c_fc
        wspec(4 * W, W), wspec(1, W),                         # mlp c_proj
    ]

    y2 = pl.pallas_call(
        make_resblock_kernel(TB, L_pad, W, H),
        out_shape=jax.ShapeDtypeStruct((B * L_pad, W), f32),
        grid=(B // TB, layers),                     # (row tiles, layers)
        in_specs=in_specs,
        out_specs=pl.BlockSpec((R, W), lambda i, l: (i, 0)),
        scratch_shapes=[pltpu.VMEM((R, W), f32)],   # resident activations
        compiler_params=pltpu.CompilerParams(
            dimension_semantics=("parallel", "arbitrary"),
            vmem_limit_bytes=64 * 1024 * 1024),
    )(mask, x2, ln1w, ln1b, wqkv, bqkv, wo, bo, ln2w, ln2b, wfc, bfc, wpr, bpr)

    # --- final LayerNorm (row-tiled) ----------------------------------------
    y2 = pl.pallas_call(
        ln_final_kernel,
        out_shape=jax.ShapeDtypeStruct((B * L_pad, W), f32),
        grid=(B // TB,),
        in_specs=[pl.BlockSpec((R, W), lambda i: (i, 0)),
                  pl.BlockSpec((1, W), lambda i: (0, 0)),
                  pl.BlockSpec((1, W), lambda i: (0, 0))],
        out_specs=pl.BlockSpec((R, W), lambda i: (i, 0)),
        compiler_params=pltpu.CompilerParams(
            dimension_semantics=("parallel",)),
    )(y2, params['lnf_w'].reshape(1, W), params['lnf_b'].reshape(1, W))

    # --- glue: drop padding, gather eot token --------------------------------
    y = y2.reshape(B, L_pad, W)[:, :L]
    eot = jnp.argmax(text, axis=-1)            # x[arange(B), text.argmax(-1)]
    return y[jnp.arange(B), eot]


# ----------------------------------------------------------------------------
# Pure-JAX f32 reference (mirrors the PyTorch forward exactly) for self-check
# ----------------------------------------------------------------------------
def build_attention_mask(L):
    return jnp.triu(jnp.full((L, L), -jnp.inf, dtype=jnp.float32), k=1)


def ref_block(x, p, mask, H):
    B, L, W = x.shape
    D = W // H
    h = _layernorm(x, p['ln1_w'], p['ln1_b'])
    qkv = h @ p['w_qkv'].T + p['b_qkv']
    q, k, v = jnp.split(qkv, 3, axis=-1)
    q = q.reshape(B, L, H, D).transpose(0, 2, 1, 3) / math.sqrt(D)
    k = k.reshape(B, L, H, D).transpose(0, 2, 1, 3)
    v = v.reshape(B, L, H, D).transpose(0, 2, 1, 3)
    s = q @ k.transpose(0, 1, 3, 2) + mask
    pat = jax.nn.softmax(s, axis=-1)
    o = (pat @ v).transpose(0, 2, 1, 3).reshape(B, L, W)
    x = x + o @ p['w_o'].T + p['b_o']
    h2 = _layernorm(x, p['ln2_w'], p['ln2_b'])
    f = h2 @ p['w_fc'].T + p['b_fc']
    f = f * jax.nn.sigmoid(1.702 * f)
    return x + f @ p['w_pr'].T + p['b_pr']


def transformer_ref(text, params, B, L, W, H):
    x = params['token_embedding'][text] + params['positional_embedding'][None]
    x = x.astype(jnp.float32)
    mask = build_attention_mask(L)
    for blk in params['blocks']:
        x = ref_block(x, blk, mask, H)
    x = _layernorm(x, params['lnf_w'], params['lnf_b'])
    eot = jnp.argmax(text, axis=-1)
    return x[jnp.arange(B), eot]


# ----------------------------------------------------------------------------
# Deterministic parameter init (shapes from the module's __init__)
# ----------------------------------------------------------------------------
def init_params(key, vocab, L, W, layers):
    keys = jax.random.split(key, 2 + layers)
    params = {
        'token_embedding': 0.02 * jax.random.normal(keys[0], (vocab, W), jnp.float32),
        'positional_embedding': 0.02 * jax.random.normal(keys[1], (L, W), jnp.float32),
        'lnf_w': jnp.ones((W,), jnp.float32),
        'lnf_b': jnp.zeros((W,), jnp.float32),
        'blocks': [],
    }
    for i in range(layers):
        k = jax.random.split(keys[2 + i], 4)
        params['blocks'].append(dict(
            ln1_w=jnp.ones((W,), jnp.float32), ln1_b=jnp.zeros((W,), jnp.float32),
            w_qkv=0.02 * jax.random.normal(k[0], (3 * W, W), jnp.float32),
            b_qkv=jnp.zeros((3 * W,), jnp.float32),
            w_o=0.02 * jax.random.normal(k[1], (W, W), jnp.float32),
            b_o=jnp.zeros((W,), jnp.float32),
            ln2_w=jnp.ones((W,), jnp.float32), ln2_b=jnp.zeros((W,), jnp.float32),
            w_fc=0.02 * jax.random.normal(k[2], (4 * W, W), jnp.float32),
            b_fc=jnp.zeros((4 * W,), jnp.float32),
            w_pr=0.02 * jax.random.normal(k[3], (W, 4 * W), jnp.float32),
            b_pr=jnp.zeros((W,), jnp.float32),
        ))
    return params


if __name__ == "__main__":
    # context_length=8, width=32, heads=4, layers=2, vocab=64, batch=2
    B, L, W, H, LAYERS, VOCAB = 2, 8, 32, 4, 2, 64
    key = jax.random.PRNGKey(0)
    kp, kt = jax.random.split(key)
    params = init_params(kp, VOCAB, L, W, LAYERS)
    text = jax.random.randint(kt, (B, L), 0, VOCAB, dtype=jnp.int32)

    # tb=1 -> grid (2 row tiles, 2 layers): exercises both the parallel row
    # axis and the sequential layer axis.
    out = transformer_pallas(text, params, B, L, W, H, tb=1)
    out = jax.block_until_ready(out)
    assert out.shape == (B, W)

    ref = transformer_ref(text, params, B, L, W, H)
    # bf16 MXU inputs -> slightly looser tolerance than pure-f32
    np.testing.assert_allclose(np.asarray(out), np.asarray(ref),
                               atol=5e-2, rtol=5e-2)
    print("KERNEL_OK")
</pallas_src>

<mosaic_0001>
module attributes {stable_mosaic.version = 11 : i64} {
  func.func @kernel(%arg0: i32, %arg1: i32, %arg2: memref<8x8xf32, #tpu.memory_space<vmem>>, %arg3: memref<8x32xf32, #tpu.memory_space<vmem>>, %arg4: memref<1x1x32xf32, #tpu.memory_space<vmem>>, %arg5: memref<1x1x32xf32, #tpu.memory_space<vmem>>, %arg6: memref<1x32x96xbf16, #tpu.memory_space<vmem>>, %arg7: memref<1x1x96xf32, #tpu.memory_space<vmem>>, %arg8: memref<1x32x32xbf16, #tpu.memory_space<vmem>>, %arg9: memref<1x1x32xf32, #tpu.memory_space<vmem>>, %arg10: memref<1x1x32xf32, #tpu.memory_space<vmem>>, %arg11: memref<1x1x32xf32, #tpu.memory_space<vmem>>, %arg12: memref<1x32x128xbf16, #tpu.memory_space<vmem>>, %arg13: memref<1x1x128xf32, #tpu.memory_space<vmem>>, %arg14: memref<1x128x32xbf16, #tpu.memory_space<vmem>>, %arg15: memref<1x1x32xf32, #tpu.memory_space<vmem>>, %arg16: memref<8x32xf32, #tpu.memory_space<vmem>>, %arg17: memref<8x32xf32, #tpu.memory_space<vmem>>) attributes {dimension_semantics = [#tpu.dimension_semantics<parallel>, #tpu.dimension_semantics<arbitrary>], iteration_bounds = array<i64: 2, 2>, scalar_prefetch = 0 : i64, scratch_operands = 1 : i64, tpu.core_type = #tpu.core_type<tc>, window_params = [{pipeline_mode = #tpu.pipeline_mode<synchronous>, transform_indices = @transform_0, window_bounds = array<i64: 8, 8>}, {transform_indices = @transform_1, window_bounds = array<i64: 8, 32>}, {transform_indices = @transform_2, window_bounds = array<i64: 1, 1, 32>}, {transform_indices = @transform_3, window_bounds = array<i64: 1, 1, 32>}, {transform_indices = @transform_4, window_bounds = array<i64: 1, 32, 96>}, {transform_indices = @transform_5, window_bounds = array<i64: 1, 1, 96>}, {transform_indices = @transform_6, window_bounds = array<i64: 1, 32, 32>}, {transform_indices = @transform_7, window_bounds = array<i64: 1, 1, 32>}, {transform_indices = @transform_8, window_bounds = array<i64: 1, 1, 32>}, {transform_indices = @transform_9, window_bounds = array<i64: 1, 1, 32>}, {transform_indices = @transform_10, window_bounds = array<i64: 1, 32, 128>}, {transform_indices = @transform_11, window_bounds = array<i64: 1, 1, 128>}, {transform_indices = @transform_12, window_bounds = array<i64: 1, 128, 32>}, {transform_indices = @transform_13, window_bounds = array<i64: 1, 1, 32>}, {transform_indices = @transform_14, window_bounds = array<i64: 8, 32>}]} {
    %c0_i32 = arith.constant 0 : i32
    %0 = arith.cmpi eq, %arg1, %c0_i32 : i32
    %1 = arith.extui %0 : i1 to i32
    %c0_i32_0 = arith.constant 0 : i32
    %2 = arith.cmpi ne, %1, %c0_i32_0 : i32
    scf.if %2 {
      %c0_75 = arith.constant 0 : index
      %c0_76 = arith.constant 0 : index
      %188 = vector.load %arg3[%c0_75, %c0_76] : memref<8x32xf32, #tpu.memory_space<vmem>>, vector<8x32xf32>
      %c0_77 = arith.constant 0 : index
      %c0_78 = arith.constant 0 : index
      %189 = vector.load %arg17[%c0_77, %c0_78] : memref<8x32xf32, #tpu.memory_space<vmem>>, vector<8x32xf32>
      tpu.vector_store %arg17[%c0_77, %c0_78], %188 {strides = array<i32>} : memref<8x32xf32, #tpu.memory_space<vmem>>, vector<8x32xf32>,
    } else {
    }
    %c0 = arith.constant 0 : index
    %c0_1 = arith.constant 0 : index
    %3 = vector.load %arg17[%c0, %c0_1] : memref<8x32xf32, #tpu.memory_space<vmem>>, vector<8x32xf32>
    %c0_2 = arith.constant 0 : index
    %c0_3 = arith.constant 0 : index
    %4 = vector.load %arg2[%c0_2, %c0_3] : memref<8x8xf32, #tpu.memory_space<vmem>>, vector<8x8xf32>
    %c0_4 = arith.constant 0 : index
    %c0_5 = arith.constant 0 : index
    %c0_6 = arith.constant 0 : index
    %5 = vector.load %arg4[%c0_4, %c0_5, %c0_6] : memref<1x1x32xf32, #tpu.memory_space<vmem>>, vector<1x1x32xf32>
    %6 = vector.shape_cast %5 : vector<1x1x32xf32> to vector<1x32xf32>
    %c0_7 = arith.constant 0 : index
    %c0_8 = arith.constant 0 : index
    %c0_9 = arith.constant 0 : index
    %7 = vector.load %arg5[%c0_7, %c0_8, %c0_9] : memref<1x1x32xf32, #tpu.memory_space<vmem>>, vector<1x1x32xf32>
    %8 = vector.shape_cast %7 : vector<1x1x32xf32> to vector<1x32xf32>
    %cst = arith.constant dense<0.000000e+00> : vector<8xf32>
    %9 = vector.multi_reduction <add>, %3, %cst [1] : vector<8x32xf32> to vector<8xf32>
    %10 = vector.shape_cast %9 : vector<8xf32> to vector<8x1xf32>
    %cst_10 = arith.constant 3.200000e+01 : f32
    %11 = vector.broadcast %cst_10 : f32 to vector<8x1xf32>
    %12 = arith.divf %10, %11 : vector<8x1xf32>
    %13 = vector.broadcast %12 : vector<8x1xf32> to vector<8x32xf32>
    %14 = arith.subf %3, %13 : vector<8x32xf32>
    %15 = arith.mulf %14, %14 : vector<8x32xf32>
    %cst_11 = arith.constant dense<0.000000e+00> : vector<8xf32>
    %16 = vector.multi_reduction <add>, %15, %cst_11 [1] : vector<8x32xf32> to vector<8xf32>
    %17 = vector.shape_cast %16 : vector<8xf32> to vector<8x1xf32>
    %cst_12 = arith.constant 3.200000e+01 : f32
    %18 = vector.broadcast %cst_12 : f32 to vector<8x1xf32>
    %19 = arith.divf %17, %18 : vector<8x1xf32>
    %20 = vector.broadcast %12 : vector<8x1xf32> to vector<8x32xf32>
    %21 = arith.subf %3, %20 : vector<8x32xf32>
    %cst_13 = arith.constant 9.99999996E-13 : f32
    %22 = vector.broadcast %cst_13 : f32 to vector<8x1xf32>
    %23 = arith.addf %19, %22 : vector<8x1xf32>
    %24 = math.sqrt %23 : vector<8x1xf32>
    %25 = vector.broadcast %24 : vector<8x1xf32> to vector<8x32xf32>
    %26 = arith.divf %21, %25 : vector<8x32xf32>
    %27 = vector.broadcast %6 : vector<1x32xf32> to vector<8x32xf32>
    %28 = arith.mulf %27, %26 : vector<8x32xf32>
    %29 = vector.broadcast %8 : vector<1x32xf32> to vector<8x32xf32>
    %30 = arith.addf %28, %29 : vector<8x32xf32>
    %31 = arith.truncf %30 : vector<8x32xf32> to vector<8x32xbf16>
    %c0_14 = arith.constant 0 : index
    %c0_15 = arith.constant 0 : index
    %c0_16 = arith.constant 0 : index
    %32 = vector.load %arg6[%c0_14, %c0_15, %c0_16] : memref<1x32x96xbf16, #tpu.memory_space<vmem>>, vector<1x32x96xbf16>
    %33 = vector.shape_cast %32 : vector<1x32x96xbf16> to vector<32x96xbf16>
    %cst_17 = arith.constant dense<0.000000e+00> : vector<8x96xf32>
    %34 = tpu.matmul %31, %33, %cst_17 {dimension_numbers = #tpu.dot_dimension_numbers<[1], [0], [0], [1], [0, 0, 1, 1], [], []>} : vector<8x32xbf16>, vector<32x96xbf16>, vector<8x96xf32> -> vector<8x96xf32>
    %c0_18 = arith.constant 0 : index
    %c0_19 = arith.constant 0 : index
    %c0_20 = arith.constant 0 : index
    %35 = vector.load %arg7[%c0_18, %c0_19, %c0_20] : memref<1x1x96xf32, #tpu.memory_space<vmem>>, vector<1x1x96xf32>
    %36 = vector.shape_cast %35 : vector<1x1x96xf32> to vector<1x96xf32>
    %37 = vector.broadcast %36 : vector<1x96xf32> to vector<8x96xf32>
    %38 = arith.addf %34, %37 : vector<8x96xf32>
    %39 = vector.extract_strided_slice %38 {offsets = [0, 0], sizes = [8, 32], strides = [1, 1]} : vector<8x96xf32> to vector<8x32xf32>
    %cst_21 = arith.constant 0.353553385 : f32
    %40 = vector.broadcast %cst_21 : f32 to vector<8x32xf32>
    %41 = arith.mulf %39, %40 : vector<8x32xf32>
    %42 = arith.truncf %41 : vector<8x32xf32> to vector<8x32xbf16>
    %43 = vector.shape_cast %42 : vector<8x32xbf16> to vector<1x8x32xbf16>
    %44 = vector.extract_strided_slice %38 {offsets = [0, 32], sizes = [8, 32], strides = [1, 1]} : vector<8x96xf32> to vector<8x32xf32>
    %45 = arith.truncf %44 : vector<8x32xf32> to vector<8x32xbf16>
    %46 = vector.shape_cast %45 : vector<8x32xbf16> to vector<1x8x32xbf16>
    %47 = vector.extract_strided_slice %38 {offsets = [0, 64], sizes = [8, 32], strides = [1, 1]} : vector<8x96xf32> to vector<8x32xf32>
    %48 = arith.truncf %47 : vector<8x32xf32> to vector<8x32xbf16>
    %49 = vector.shape_cast %48 : vector<8x32xbf16> to vector<1x8x32xbf16>
    %50 = vector.extract_strided_slice %43 {offsets = [0, 0, 0], sizes = [1, 8, 8], strides = [1, 1, 1]} : vector<1x8x32xbf16> to vector<1x8x8xbf16>
    %51 = vector.extract_strided_slice %46 {offsets = [0, 0, 0], sizes = [1, 8, 8], strides = [1, 1, 1]} : vector<1x8x32xbf16> to vector<1x8x8xbf16>
    "tpu.trace_start"() <{level = 10 : i32, message = "bqd,bkd->bqk"}> : () -> ()
    %cst_22 = arith.constant dense<0.000000e+00> : vector<1x8x8xf32>
    %52 = tpu.matmul %50, %51, %cst_22 {dimension_numbers = #tpu.dot_dimension_numbers<[2], [2], [1], [1], [0, 0, 0, 1, 1, 1], [0], [0]>} : vector<1x8x8xbf16>, vector<1x8x8xbf16>, vector<1x8x8xf32> -> vector<1x8x8xf32>
    "tpu.trace_stop"() : () -> ()
    %53 = vector.shape_cast %4 : vector<8x8xf32> to vector<1x8x8xf32>
    %54 = arith.addf %52, %53 : vector<1x8x8xf32>
    %cst_23 = arith.constant dense<0xFF800000> : vector<1x8xf32>
    %55 = vector.multi_reduction <maximumf>, %54, %cst_23 [2] : vector<1x8x8xf32> to vector<1x8xf32>
    %56 = vector.shape_cast %55 : vector<1x8xf32> to vector<1x8x1xf32>
    %57 = vector.broadcast %56 : vector<1x8x1xf32> to vector<1x8x8xf32>
    %58 = arith.subf %54, %57 : vector<1x8x8xf32>
    %59 = math.exp %58 : vector<1x8x8xf32>
    %cst_24 = arith.constant dense<0.000000e+00> : vector<1x8xf32>
    %60 = vector.multi_reduction <add>, %59, %cst_24 [2] : vector<1x8x8xf32> to vector<1x8xf32>
    %61 = vector.shape_cast %60 : vector<1x8xf32> to vector<1x8x1xf32>
    %62 = tpu.reciprocal %61 {approx = true} : vector<1x8x1xf32> -> vector<1x8x1xf32>
    %63 = vector.broadcast %62 : vector<1x8x1xf32> to vector<1x8x8xf32>
    %64 = arith.mulf %59, %63 : vector<1x8x8xf32>
    %65 = arith.truncf %64 : vector<1x8x8xf32> to vector<1x8x8xbf16>
    %66 = vector.extract_strided_slice %49 {offsets = [0, 0, 0], sizes = [1, 8, 8], strides = [1, 1, 1]} : vector<1x8x32xbf16> to vector<1x8x8xbf16>
    "tpu.trace_start"() <{level = 10 : i32, message = "bqk,bkd->bqd"}> : () -> ()
    %cst_25 = arith.constant dense<0.000000e+00> : vector<1x8x8xf32>
    %67 = tpu.matmul %65, %66, %cst_25 {dimension_numbers = #tpu.dot_dimension_numbers<[2], [1], [1], [2], [0, 0, 0, 1, 1, 2], [0], [0]>} : vector<1x8x8xbf16>, vector<1x8x8xbf16>, vector<1x8x8xf32> -> vector<1x8x8xf32>
    "tpu.trace_stop"() : () -> ()
    %68 = vector.extract_strided_slice %43 {offsets = [0, 0, 8], sizes = [1, 8, 8], strides = [1, 1, 1]} : vector<1x8x32xbf16> to vector<1x8x8xbf16>
    %69 = vector.extract_strided_slice %46 {offsets = [0, 0, 8], sizes = [1, 8, 8], strides = [1, 1, 1]} : vector<1x8x32xbf16> to vector<1x8x8xbf16>
    "tpu.trace_start"() <{level = 10 : i32, message = "bqd,bkd->bqk"}> : () -> ()
    %cst_26 = arith.constant dense<0.000000e+00> : vector<1x8x8xf32>
    %70 = tpu.matmul %68, %69, %cst_26 {dimension_numbers = #tpu.dot_dimension_numbers<[2], [2], [1], [1], [0, 0, 0, 1, 1, 1], [0], [0]>} : vector<1x8x8xbf16>, vector<1x8x8xbf16>, vector<1x8x8xf32> -> vector<1x8x8xf32>
    "tpu.trace_stop"() : () -> ()
    %71 = vector.shape_cast %4 : vector<8x8xf32> to vector<1x8x8xf32>
    %72 = arith.addf %70, %71 : vector<1x8x8xf32>
    %cst_27 = arith.constant dense<0xFF800000> : vector<1x8xf32>
    %73 = vector.multi_reduction <maximumf>, %72, %cst_27 [2] : vector<1x8x8xf32> to vector<1x8xf32>
    %74 = vector.shape_cast %73 : vector<1x8xf32> to vector<1x8x1xf32>
    %75 = vector.broadcast %74 : vector<1x8x1xf32> to vector<1x8x8xf32>
    %76 = arith.subf %72, %75 : vector<1x8x8xf32>
    %77 = math.exp %76 : vector<1x8x8xf32>
    %cst_28 = arith.constant dense<0.000000e+00> : vector<1x8xf32>
    %78 = vector.multi_reduction <add>, %77, %cst_28 [2] : vector<1x8x8xf32> to vector<1x8xf32>
    %79 = vector.shape_cast %78 : vector<1x8xf32> to vector<1x8x1xf32>
    %80 = tpu.reciprocal %79 {approx = true} : vector<1x8x1xf32> -> vector<1x8x1xf32>
    %81 = vector.broadcast %80 : vector<1x8x1xf32> to vector<1x8x8xf32>
    %82 = arith.mulf %77, %81 : vector<1x8x8xf32>
    %83 = arith.truncf %82 : vector<1x8x8xf32> to vector<1x8x8xbf16>
    %84 = vector.extract_strided_slice %49 {offsets = [0, 0, 8], sizes = [1, 8, 8], strides = [1, 1, 1]} : vector<1x8x32xbf16> to vector<1x8x8xbf16>
    "tpu.trace_start"() <{level = 10 : i32, message = "bqk,bkd->bqd"}> : () -> ()
    %cst_29 = arith.constant dense<0.000000e+00> : vector<1x8x8xf32>
    %85 = tpu.matmul %83, %84, %cst_29 {dimension_numbers = #tpu.dot_dimension_numbers<[2], [1], [1], [2], [0, 0, 0, 1, 1, 2], [0], [0]>} : vector<1x8x8xbf16>, vector<1x8x8xbf16>, vector<1x8x8xf32> -> vector<1x8x8xf32>
    "tpu.trace_stop"() : () -> ()
    %86 = vector.extract_strided_slice %43 {offsets = [0, 0, 16], sizes = [1, 8, 8], strides = [1, 1, 1]} : vector<1x8x32xbf16> to vector<1x8x8xbf16>
    %87 = vector.extract_strided_slice %46 {offsets = [0, 0, 16], sizes = [1, 8, 8], strides = [1, 1, 1]} : vector<1x8x32xbf16> to vector<1x8x8xbf16>
    "tpu.trace_start"() <{level = 10 : i32, message = "bqd,bkd->bqk"}> : () -> ()
    %cst_30 = arith.constant dense<0.000000e+00> : vector<1x8x8xf32>
    %88 = tpu.matmul %86, %87, %cst_30 {dimension_numbers = #tpu.dot_dimension_numbers<[2], [2], [1], [1], [0, 0, 0, 1, 1, 1], [0], [0]>} : vector<1x8x8xbf16>, vector<1x8x8xbf16>, vector<1x8x8xf32> -> vector<1x8x8xf32>
    "tpu.trace_stop"() : () -> ()
    %89 = vector.shape_cast %4 : vector<8x8xf32> to vector<1x8x8xf32>
    %90 = arith.addf %88, %89 : vector<1x8x8xf32>
    %cst_31 = arith.constant dense<0xFF800000> : vector<1x8xf32>
    %91 = vector.multi_reduction <maximumf>, %90, %cst_31 [2] : vector<1x8x8xf32> to vector<1x8xf32>
    %92 = vector.shape_cast %91 : vector<1x8xf32> to vector<1x8x1xf32>
    %93 = vector.broadcast %92 : vector<1x8x1xf32> to vector<1x8x8xf32>
    %94 = arith.subf %90, %93 : vector<1x8x8xf32>
    %95 = math.exp %94 : vector<1x8x8xf32>
    %cst_32 = arith.constant dense<0.000000e+00> : vector<1x8xf32>
    %96 = vector.multi_reduction <add>, %95, %cst_32 [2] : vector<1x8x8xf32> to vector<1x8xf32>
    %97 = vector.shape_cast %96 : vector<1x8xf32> to vector<1x8x1xf32>
    %98 = tpu.reciprocal %97 {approx = true} : vector<1x8x1xf32> -> vector<1x8x1xf32>
    %99 = vector.broadcast %98 : vector<1x8x1xf32> to vector<1x8x8xf32>
    %100 = arith.mulf %95, %99 : vector<1x8x8xf32>
    %101 = arith.truncf %100 : vector<1x8x8xf32> to vector<1x8x8xbf16>
    %102 = vector.extract_strided_slice %49 {offsets = [0, 0, 16], sizes = [1, 8, 8], strides = [1, 1, 1]} : vector<1x8x32xbf16> to vector<1x8x8xbf16>
    "tpu.trace_start"() <{level = 10 : i32, message = "bqk,bkd->bqd"}> : () -> ()
    %cst_33 = arith.constant dense<0.000000e+00> : vector<1x8x8xf32>
    %103 = tpu.matmul %101, %102, %cst_33 {dimension_numbers = #tpu.dot_dimension_numbers<[2], [1], [1], [2], [0, 0, 0, 1, 1, 2], [0], [0]>} : vector<1x8x8xbf16>, vector<1x8x8xbf16>, vector<1x8x8xf32> -> vector<1x8x8xf32>
    "tpu.trace_stop"() : () -> ()
    %104 = vector.extract_strided_slice %43 {offsets = [0, 0, 24], sizes = [1, 8, 8], strides = [1, 1, 1]} : vector<1x8x32xbf16> to vector<1x8x8xbf16>
    %105 = vector.extract_strided_slice %46 {offsets = [0, 0, 24], sizes = [1, 8, 8], strides = [1, 1, 1]} : vector<1x8x32xbf16> to vector<1x8x8xbf16>
    "tpu.trace_start"() <{level = 10 : i32, message = "bqd,bkd->bqk"}> : () -> ()
    %cst_34 = arith.constant dense<0.000000e+00> : vector<1x8x8xf32>
    %106 = tpu.matmul %104, %105, %cst_34 {dimension_numbers = #tpu.dot_dimension_numbers<[2], [2], [1], [1], [0, 0, 0, 1, 1, 1], [0], [0]>} : vector<1x8x8xbf16>, vector<1x8x8xbf16>, vector<1x8x8xf32> -> vector<1x8x8xf32>
    "tpu.trace_stop"() : () -> ()
    %107 = vector.shape_cast %4 : vector<8x8xf32> to vector<1x8x8xf32>
    %108 = arith.addf %106, %107 : vector<1x8x8xf32>
    %cst_35 = arith.constant dense<0xFF800000> : vector<1x8xf32>
    %109 = vector.multi_reduction <maximumf>, %108, %cst_35 [2] : vector<1x8x8xf32> to vector<1x8xf32>
    %110 = vector.shape_cast %109 : vector<1x8xf32> to vector<1x8x1xf32>
    %111 = vector.broadcast %110 : vector<1x8x1xf32> to vector<1x8x8xf32>
    %112 = arith.subf %108, %111 : vector<1x8x8xf32>
    %113 = math.exp %112 : vector<1x8x8xf32>
    %cst_36 = arith.constant dense<0.000000e+00> : vector<1x8xf32>
    %114 = vector.multi_reduction <add>, %113, %cst_36 [2] : vector<1x8x8xf32> to vector<1x8xf32>
    %115 = vector.shape_cast %114 : vector<1x8xf32> to vector<1x8x1xf32>
    %116 = tpu.reciprocal %115 {approx = true} : vector<1x8x1xf32> -> vector<1x8x1xf32>
    %117 = vector.broadcast %116 : vector<1x8x1xf32> to vector<1x8x8xf32>
    %118 = arith.mulf %113, %117 : vector<1x8x8xf32>
    %119 = arith.truncf %118 : vector<1x8x8xf32> to vector<1x8x8xbf16>
    %120 = vector.extract_strided_slice %49 {offsets = [0, 0, 24], sizes = [1, 8, 8], strides = [1, 1, 1]} : vector<1x8x32xbf16> to vector<1x8x8xbf16>
    "tpu.trace_start"() <{level = 10 : i32, message = "bqk,bkd->bqd"}> : () -> ()
    %cst_37 = arith.constant dense<0.000000e+00> : vector<1x8x8xf32>
    %121 = tpu.matmul %119, %120, %cst_37 {dimension_numbers = #tpu.dot_dimension_numbers<[2], [1], [1], [2], [0, 0, 0, 1, 1, 2], [0], [0]>} : vector<1x8x8xbf16>, vector<1x8x8xbf16>, vector<1x8x8xf32> -> vector<1x8x8xf32>
    "tpu.trace_stop"() : () -> ()
    %122 = tpu.concatenate %67, %85, %103, %121 in 2 : vector<1x8x8xf32>, vector<1x8x8xf32>, vector<1x8x8xf32>, vector<1x8x8xf32> -> vector<1x8x32xf32>
    %123 = vector.shape_cast %122 : vector<1x8x32xf32> to vector<8x32xf32>
    %124 = arith.truncf %123 : vector<8x32xf32> to vector<8x32xbf16>
    %c0_38 = arith.constant 0 : index
    %c0_39 = arith.constant 0 : index
    %c0_40 = arith.constant 0 : index
    %125 = vector.load %arg8[%c0_38, %c0_39, %c0_40] : memref<1x32x32xbf16, #tpu.memory_space<vmem>>, vector<1x32x32xbf16>
    %126 = vector.shape_cast %125 : vector<1x32x32xbf16> to vector<32x32xbf16>
    %cst_41 = arith.constant dense<0.000000e+00> : vector<8x32xf32>
    %127 = tpu.matmul %124, %126, %cst_41 {dimension_numbers = #tpu.dot_dimension_numbers<[1], [0], [0], [1], [0, 0, 1, 1], [], []>} : vector<8x32xbf16>, vector<32x32xbf16>, vector<8x32xf32> -> vector<8x32xf32>
    %128 = arith.addf %3, %127 : vector<8x32xf32>
    %c0_42 = arith.constant 0 : index
    %c0_43 = arith.constant 0 : index
    %c0_44 = arith.constant 0 : index
    %129 = vector.load %arg9[%c0_42, %c0_43, %c0_44] : memref<1x1x32xf32, #tpu.memory_space<vmem>>, vector<1x1x32xf32>
    %130 = vector.shape_cast %129 : vector<1x1x32xf32> to vector<1x32xf32>
    %131 = vector.broadcast %130 : vector<1x32xf32> to vector<8x32xf32>
    %132 = arith.addf %128, %131 : vector<8x32xf32>
    %c0_45 = arith.constant 0 : index
    %c0_46 = arith.constant 0 : index
    %c0_47 = arith.constant 0 : index
    %133 = vector.load %arg10[%c0_45, %c0_46, %c0_47] : memref<1x1x32xf32, #tpu.memory_space<vmem>>, vector<1x1x32xf32>
    %134 = vector.shape_cast %133 : vector<1x1x32xf32> to vector<1x32xf32>
    %c0_48 = arith.constant 0 : index
    %c0_49 = arith.constant 0 : index
    %c0_50 = arith.constant 0 : index
    %135 = vector.load %arg11[%c0_48, %c0_49, %c0_50] : memref<1x1x32xf32, #tpu.memory_space<vmem>>, vector<1x1x32xf32>
    %136 = vector.shape_cast %135 : vector<1x1x32xf32> to vector<1x32xf32>
    %cst_51 = arith.constant dense<0.000000e+00> : vector<8xf32>
    %137 = vector.multi_reduction <add>, %132, %cst_51 [1] : vector<8x32xf32> to vector<8xf32>
    %138 = vector.shape_cast %137 : vector<8xf32> to vector<8x1xf32>
    %cst_52 = arith.constant 3.200000e+01 : f32
    %139 = vector.broadcast %cst_52 : f32 to vector<8x1xf32>
    %140 = arith.divf %138, %139 : vector<8x1xf32>
    %141 = vector.broadcast %140 : vector<8x1xf32> to vector<8x32xf32>
    %142 = arith.subf %132, %141 : vector<8x32xf32>
    %143 = arith.mulf %142, %142 : vector<8x32xf32>
    %cst_53 = arith.constant dense<0.000000e+00> : vector<8xf32>
    %144 = vector.multi_reduction <add>, %143, %cst_53 [1] : vector<8x32xf32> to vector<8xf32>
    %145 = vector.shape_cast %144 : vector<8xf32> to vector<8x1xf32>
    %cst_54 = arith.constant 3.200000e+01 : f32
    %146 = vector.broadcast %cst_54 : f32 to vector<8x1xf32>
    %147 = arith.divf %145, %146 : vector<8x1xf32>
    %148 = vector.broadcast %140 : vector<8x1xf32> to vector<8x32xf32>
    %149 = arith.subf %132, %148 : vector<8x32xf32>
    %cst_55 = arith.constant 9.99999996E-13 : f32
    %150 = vector.broadcast %cst_55 : f32 to vector<8x1xf32>
    %151 = arith.addf %147, %150 : vector<8x1xf32>
    %152 = math.sqrt %151 : vector<8x1xf32>
    %153 = vector.broadcast %152 : vector<8x1xf32> to vector<8x32xf32>
    %154 = arith.divf %149, %153 : vector<8x32xf32>
    %155 = vector.broadcast %134 : vector<1x32xf32> to vector<8x32xf32>
    %156 = arith.mulf %155, %154 : vector<8x32xf32>
    %157 = vector.broadcast %136 : vector<1x32xf32> to vector<8x32xf32>
    %158 = arith.addf %156, %157 : vector<8x32xf32>
    %159 = arith.truncf %158 : vector<8x32xf32> to vector<8x32xbf16>
    %c0_56 = arith.constant 0 : index
    %c0_57 = arith.constant 0 : index
    %c0_58 = arith.constant 0 : index
    %160 = vector.load %arg12[%c0_56, %c0_57, %c0_58] : memref<1x32x128xbf16, #tpu.memory_space<vmem>>, vector<1x32x128xbf16>
    %161 = vector.shape_cast %160 : vector<1x32x128xbf16> to vector<32x128xbf16>
    %cst_59 = arith.constant dense<0.000000e+00> : vector<8x128xf32>
    %162 = tpu.matmul %159, %161, %cst_59 {dimension_numbers = #tpu.dot_dimension_numbers<[1], [0], [0], [1], [0, 0, 1, 1], [], []>} : vector<8x32xbf16>, vector<32x128xbf16>, vector<8x128xf32> -> vector<8x128xf32>
    %c0_60 = arith.constant 0 : index
    %c0_61 = arith.constant 0 : index
    %c0_62 = arith.constant 0 : index
    %163 = vector.load %arg13[%c0_60, %c0_61, %c0_62] : memref<1x1x128xf32, #tpu.memory_space<vmem>>, vector<1x1x128xf32>
    %164 = vector.shape_cast %163 : vector<1x1x128xf32> to vector<1x128xf32>
    %165 = vector.broadcast %164 : vector<1x128xf32> to vector<8x128xf32>
    %166 = arith.addf %162, %165 : vector<8x128xf32>
    %cst_63 = arith.constant 1.702000e+00 : f32
    %167 = vector.broadcast %cst_63 : f32 to vector<8x128xf32>
    %168 = arith.mulf %167, %166 : vector<8x128xf32>
    %169 = arith.negf %168 : vector<8x128xf32>
    %170 = math.exp %169 : vector<8x128xf32>
    %cst_64 = arith.constant 1.000000e+00 : f32
    %171 = vector.broadcast %cst_64 : f32 to vector<8x128xf32>
    %172 = arith.addf %171, %170 : vector<8x128xf32>
    %173 = arith.divf %171, %172 : vector<8x128xf32>
    %174 = arith.mulf %166, %173 : vector<8x128xf32>
    %175 = arith.truncf %174 : vector<8x128xf32> to vector<8x128xbf16>
    %c0_65 = arith.constant 0 : index
    %c0_66 = arith.constant 0 : index
    %c0_67 = arith.constant 0 : index
    %176 = vector.load %arg14[%c0_65, %c0_66, %c0_67] : memref<1x128x32xbf16, #tpu.memory_space<vmem>>, vector<1x128x32xbf16>
    %177 = vector.shape_cast %176 : vector<1x128x32xbf16> to vector<128x32xbf16>
    %cst_68 = arith.constant dense<0.000000e+00> : vector<8x32xf32>
    %178 = tpu.matmul %175, %177, %cst_68 {dimension_numbers = #tpu.dot_dimension_numbers<[1], [0], [0], [1], [0, 0, 1, 1], [], []>} : vector<8x128xbf16>, vector<128x32xbf16>, vector<8x32xf32> -> vector<8x32xf32>
    %179 = arith.addf %132, %178 : vector<8x32xf32>
    %c0_69 = arith.constant 0 : index
    %c0_70 = arith.constant 0 : index
    %c0_71 = arith.constant 0 : index
    %180 = vector.load %arg15[%c0_69, %c0_70, %c0_71] : memref<1x1x32xf32, #tpu.memory_space<vmem>>, vector<1x1x32xf32>
    %181 = vector.shape_cast %180 : vector<1x1x32xf32> to vector<1x32xf32>
    %182 = vector.broadcast %181 : vector<1x32xf32> to vector<8x32xf32>
    %183 = arith.addf %179, %182 : vector<8x32xf32>
    %c0_72 = arith.constant 0 : index
    %c0_73 = arith.constant 0 : index
    %184 = vector.load %arg17[%c0_72, %c0_73] : memref<8x32xf32, #tpu.memory_space<vmem>>, vector<8x32xf32>
    tpu.vector_store %arg17[%c0_72, %c0_73], %183 {strides = array<i32>} : memref<8x32xf32, #tpu.memory_space<vmem>>, vector<8x32xf32>,
    %c1_i32 = arith.constant 1 : i32
    %185 = arith.cmpi eq, %arg1, %c1_i32 : i32
    %186 = arith.extui %185 : i1 to i32
    %c0_i32_74 = arith.constant 0 : i32
    %187 = arith.cmpi ne, %186, %c0_i32_74 : i32
    scf.if %187 {
      %c0_75 = arith.constant 0 : index
      %c0_76 = arith.constant 0 : index
      %188 = vector.load %arg16[%c0_75, %c0_76] : memref<8x32xf32, #tpu.memory_space<vmem>>, vector<8x32xf32>
      tpu.vector_store %arg16[%c0_75, %c0_76], %183 {strides = array<i32>} : memref<8x32xf32, #tpu.memory_space<vmem>>, vector<8x32xf32>,
    } else {
    }
    return
  }
  func.func @transform_0(%arg0: i32, %arg1: i32) -> (i32, i32) {
    %c0_i32 = arith.constant 0 : i32
    %c0_i32_0 = arith.constant 0 : i32
    %c0_i32_1 = arith.constant 0 : i32
    return %c0_i32, %c0_i32_0 : i32, i32
  }
  func.func @transform_1(%arg0: i32, %arg1: i32) -> (i32, i32) {
    %c0_i32 = arith.constant 0 : i32
    %c0_i32_0 = arith.constant 0 : i32
    return %arg0, %c0_i32 : i32, i32
  }
  func.func @transform_2(%arg0: i32, %arg1: i32) -> (i32, i32, i32) {
    %c0_i32 = arith.constant 0 : i32
    %c0_i32_0 = arith.constant 0 : i32
    %c0_i32_1 = arith.constant 0 : i32
    return %arg1, %c0_i32, %c0_i32_0 : i32, i32, i32
  }
  func.func @transform_3(%arg0: i32, %arg1: i32) -> (i32, i32, i32) {
    %c0_i32 = arith.constant 0 : i32
    %c0_i32_0 = arith.constant 0 : i32
    %c0_i32_1 = arith.constant 0 : i32
    return %arg1, %c0_i32, %c0_i32_0 : i32, i32, i32
  }
  func.func @transform_4(%arg0: i32, %arg1: i32) -> (i32, i32, i32) {
    %c0_i32 = arith.constant 0 : i32
    %c0_i32_0 = arith.constant 0 : i32
    %c0_i32_1 = arith.constant 0 : i32
    return %arg1, %c0_i32, %c0_i32_0 : i32, i32, i32
  }
  func.func @transform_5(%arg0: i32, %arg1: i32) -> (i32, i32, i32) {
    %c0_i32 = arith.constant 0 : i32
    %c0_i32_0 = arith.constant 0 : i32
    %c0_i32_1 = arith.constant 0 : i32
    return %arg1, %c0_i32, %c0_i32_0 : i32, i32, i32
  }
  func.func @transform_6(%arg0: i32, %arg1: i32) -> (i32, i32, i32) {
    %c0_i32 = arith.constant 0 : i32
    %c0_i32_0 = arith.constant 0 : i32
    %c0_i32_1 = arith.constant 0 : i32
    return %arg1, %c0_i32, %c0_i32_0 : i32, i32, i32
  }
  func.func @transform_7(%arg0: i32, %arg1: i32) -> (i32, i32, i32) {
    %c0_i32 = arith.constant 0 : i32
    %c0_i32_0 = arith.constant 0 : i32
    %c0_i32_1 = arith.constant 0 : i32
    return %arg1, %c0_i32, %c0_i32_0 : i32, i32, i32
  }
  func.func @transform_8(%arg0: i32, %arg1: i32) -> (i32, i32, i32) {
    %c0_i32 = arith.constant 0 : i32
    %c0_i32_0 = arith.constant 0 : i32
    %c0_i32_1 = arith.constant 0 : i32
    return %arg1, %c0_i32, %c0_i32_0 : i32, i32, i32
  }
  func.func @transform_9(%arg0: i32, %arg1: i32) -> (i32, i32, i32) {
    %c0_i32 = arith.constant 0 : i32
    %c0_i32_0 = arith.constant 0 : i32
    %c0_i32_1 = arith.constant 0 : i32
    return %arg1, %c0_i32, %c0_i32_0 : i32, i32, i32
  }
  func.func @transform_10(%arg0: i32, %arg1: i32) -> (i32, i32, i32) {
    %c0_i32 = arith.constant 0 : i32
    %c0_i32_0 = arith.constant 0 : i32
    %c0_i32_1 = arith.constant 0 : i32
    return %arg1, %c0_i32, %c0_i32_0 : i32, i32, i32
  }
  func.func @transform_11(%arg0: i32, %arg1: i32) -> (i32, i32, i32) {
    %c0_i32 = arith.constant 0 : i32
    %c0_i32_0 = arith.constant 0 : i32
    %c0_i32_1 = arith.constant 0 : i32
    return %arg1, %c0_i32, %c0_i32_0 : i32, i32, i32
  }
  func.func @transform_12(%arg0: i32, %arg1: i32) -> (i32, i32, i32) {
    %c0_i32 = arith.constant 0 : i32
    %c0_i32_0 = arith.constant 0 : i32
    %c0_i32_1 = arith.constant 0 : i32
    return %arg1, %c0_i32, %c0_i32_0 : i32, i32, i32
  }
  func.func @transform_13(%arg0: i32, %arg1: i32) -> (i32, i32, i32) {
    %c0_i32 = arith.constant 0 : i32
    %c0_i32_0 = arith.constant 0 : i32
    %c0_i32_1 = arith.constant 0 : i32
    return %arg1, %c0_i32, %c0_i32_0 : i32, i32, i32
  }
  func.func @transform_14(%arg0: i32, %arg1: i32) -> (i32, i32) {
    %c0_i32 = arith.constant 0 : i32
    %c0_i32_0 = arith.constant 0 : i32
    return %arg0, %c0_i32 : i32, i32
  }
}

</mosaic_0001>

<llo_original>
// kernel: tpu_custom_call.1
$region0: #{tpu_custom_call.1}
  #allocation0 [shape = 'u32[]', space=smem, size = 0x4, offset = 0x4, fixed_abs, tag = 'smem constant byte address 0x4 - core index']
  #allocation1 [shape = 'u32[144,128]{1,0:T(1,128)}', space=vmem, size = 0x12000, scoped, tag = 'internal scratch']
  #allocation2 [shape = 'f32[8,32]{1,0:T(8,128)}', space=vmem, size = 0x1000, scoped, tag = 'scratch operand']
  %s0 = inlined_call_operand.hbm [shape: f32[8,8], index: 0, kind: input, shape index: {}]
  %s1 = inlined_call_operand.hbm [shape: f32[16,32], index: 1, kind: input, shape index: {}]
  %s2 = inlined_call_operand.hbm [shape: f32[2,1,32], index: 2, kind: input, shape index: {}]
  %s3 = inlined_call_operand.hbm [shape: f32[2,1,32], index: 3, kind: input, shape index: {}]
  %s4 = inlined_call_operand.hbm [shape: bf16[2,32,96], index: 4, kind: input, shape index: {}]
  %s5 = inlined_call_operand.hbm [shape: f32[2,1,96], index: 5, kind: input, shape index: {}]
  %s6 = inlined_call_operand.hbm [shape: bf16[2,32,32], index: 6, kind: input, shape index: {}]
  %s7 = inlined_call_operand.hbm [shape: f32[2,1,32], index: 7, kind: input, shape index: {}]
  %s8 = inlined_call_operand.hbm [shape: f32[2,1,32], index: 8, kind: input, shape index: {}]
  %s9 = inlined_call_operand.hbm [shape: f32[2,1,32], index: 9, kind: input, shape index: {}]
  %s10 = inlined_call_operand.hbm [shape: bf16[2,32,128], index: 10, kind: input, shape index: {}]
  %s11 = inlined_call_operand.hbm [shape: f32[2,1,128], index: 11, kind: input, shape index: {}]
  %s12 = inlined_call_operand.hbm [shape: bf16[2,128,32], index: 12, kind: input, shape index: {}]
  %s13 = inlined_call_operand.hbm [shape: f32[2,1,32], index: 13, kind: input, shape index: {}]
  %s14 = inlined_call_operand.hbm [shape: f32[16,32], index: 14, kind: output, shape index: {}]
  %s15 = sld [smem:[#allocation0]]
  $region153: #{tpu_custom_call.1} parent=0
    _
  %s17 = ssub.s32 1, %s15
  %s18 = scalar_select 0, %s17, %s15
  $region1: #{tpu_custom_call.1} parent=0
    #allocation3 [shape = 'u8[4096]{0}', space=vmem, size = 0x1000, scoped, tag = 'input window, operand 0, single buffered']
    #allocation4 [shape = 's32[2]{0}', space=sflag, size = 0x8, scoped, tag = 'scoped memory for tpu_custom_call.1']
    #allocation5 [shape = 's32[2]{0}', space=sflag, size = 0x8, scoped, tag = 'scoped memory for tpu_custom_call.1']
    #allocation6 [shape = 'u8[8192]{0}', space=vmem, size = 0x2000, scoped, tag = 'input window, operand 1']
    #allocation7 [shape = 's32[2]{0}', space=sflag, size = 0x8, scoped, tag = 'scoped memory for tpu_custom_call.1']
    #allocation8 [shape = 'u8[1024]{0}', space=vmem, size = 0x400, scoped, tag = 'input window, operand 2']
    #allocation9 [shape = 'u8[1024]{0}', space=vmem, size = 0x400, scoped, tag = 'input window, operand 3']
    #allocation10 [shape = 's32[2]{0}', space=sflag, size = 0x8, scoped, tag = 'scoped memory for tpu_custom_call.1']
    #allocation11 [shape = 'u8[16384]{0}', space=vmem, size = 0x4000, scoped, tag = 'input window, operand 4']
    #allocation12 [shape = 'u8[1024]{0}', space=vmem, size = 0x400, scoped, tag = 'input window, operand 5']
    #allocation13 [shape = 's32[2]{0}', space=sflag, size = 0x8, scoped, tag = 'scoped memory for tpu_custom_call.1']
    #allocation14 [shape = 'u8[16384]{0}', space=vmem, size = 0x4000, scoped, tag = 'input window, operand 6']
    #allocation15 [shape = 'u8[1024]{0}', space=vmem, size = 0x400, scoped, tag = 'input window, operand 7']
    #allocation16 [shape = 's32[2]{0}', space=sflag, size = 0x8, scoped, tag = 'scoped memory for tpu_custom_call.1']
    #allocation17 [shape = 'u8[1024]{0}', space=vmem, size = 0x400, scoped, tag = 'input window, operand 8']
    #allocation18 [shape = 'u8[1024]{0}', space=vmem, size = 0x400, scoped, tag = 'input window, operand 9']
    #allocation19 [shape = 's32[2]{0}', space=sflag, size = 0x8, scoped, tag = 'scoped memory for tpu_custom_call.1']
    #allocation20 [shape = 'u8[16384]{0}', space=vmem, size = 0x4000, scoped, tag = 'input window, operand 10']
    #allocation21 [shape = 'u8[1024]{0}', space=vmem, size = 0x400, scoped, tag = 'input window, operand 11']
    #allocation22 [shape = 's32[2]{0}', space=sflag, size = 0x8, scoped, tag = 'scoped memory for tpu_custom_call.1']
    #allocation23 [shape = 'u8[65536]{0}', space=vmem, size = 0x10000, scoped, tag = 'input window, operand 12']
    #allocation24 [shape = 'u8[1024]{0}', space=vmem, size = 0x400, scoped, tag = 'input window, operand 13']
    #allocation25 [shape = 's32[2]{0}', space=sflag, size = 0x8, scoped, tag = 'scoped memory for tpu_custom_call.1']
    #allocation26 [shape = 'u8[8192]{0}', space=vmem, size = 0x2000, scoped, tag = 'output window, operand 0']
    %19 = vsyncpa [#allocation4], 0
    %20 = vsyncpa [#allocation7], 0
    %s21 = scalar_lea.sflag [#allocation7], 1
    %22 = vsyncpa %s21, 0
    %23 = vsyncpa [#allocation10], 0
    %s24 = scalar_lea.sflag [#allocation10], 1
    %25 = vsyncpa %s24, 0
    %26 = vsyncpa [#allocation13], 0
    %s27 = scalar_lea.sflag [#allocation13], 1
    %28 = vsyncpa %s27, 0
    %29 = vsyncpa [#allocation16], 0
    %s30 = scalar_lea.sflag [#allocation16], 1
    %31 = vsyncpa %s30, 0
    %32 = vsyncpa [#allocation19], 0
    %s33 = scalar_lea.sflag [#allocation19], 1
    %34 = vsyncpa %s33, 0
    %35 = vsyncpa [#allocation22], 0
    %s36 = scalar_lea.sflag [#allocation22], 1
    %37 = vsyncpa %s36, 0
    %38 = vsyncpa [#allocation25], 0
    %s39 = scalar_lea.sflag [#allocation25], 1
    %40 = vsyncpa %s39, 0
    %41 = vsyncpa [#allocation5], 0
    %s42 = scalar_lea.sflag [#allocation5], 1
    %43 = vsyncpa %s42, 0
    loop: start=0, step=1, limit=6
    $region2: #{tpu_custom_call.1} parent=1 // loop_pre_header
      _
    $region3: #{tpu_custom_call.1} parent=1 // loop_header
      %s45 = sphi 0, %s49
      %p46 = scmp.ge.s32.totalorder %s45, 6
      %s52 = sphi 0, %s64
      %s53 = sphi 0, %s60
      %s54 = sphi 0, %s52
      %s55 = sphi 0, %s53
      %s56 = sphi 0, %s54
      %s57 = sphi 0, %s55
      %s65 = sphi 0, %s65
      %s67 = sphi 0, %s65
      %s68 = sphi 0, %s67
      %s82 = sphi 0, %s68
      %s88 = sphi 0, %s90
      %s91 = sphi 0, %s88
      %s92 = sphi 0, %s91
      %s108 = sphi 0, %s92
      %s114 = sphi 0, %s116
      %s117 = sphi 0, %s114
      %s118 = sphi 0, %s117
      %s134 = sphi 0, %s118
      %s140 = sphi 0, %s142
      %s143 = sphi 0, %s140
      %s144 = sphi 0, %s143
      %s160 = sphi 0, %s144
      %s166 = sphi 0, %s168
      %s169 = sphi 0, %s166
      %s170 = sphi 0, %s169
      %s186 = sphi 0, %s170
      %s192 = sphi 0, %s194
      %s195 = sphi 0, %s192
      %s196 = sphi 0, %s195
      %s212 = sphi 0, %s196
      %s218 = sphi 0, %s220
      %s221 = sphi 0, %s218
      %s222 = sphi 0, %s221
      %s238 = sphi 0, %s222
      %s244 = sphi 0, %s246
      %s247 = sphi 0, %s244
      %s248 = sphi 0, %s247
      %s264 = sphi 0, %s248
      %s270 = sphi 0, %s272
      %s273 = sphi 0, %s270
      %s274 = sphi 0, %s273
      %s290 = sphi 0, %s274
      %s296 = sphi 0, %s298
      %s299 = sphi 0, %s296
      %s300 = sphi 0, %s299
      %s316 = sphi 0, %s300
      %s322 = sphi 0, %s324
      %s325 = sphi 0, %s322
      %s326 = sphi 0, %s325
      %s342 = sphi 0, %s326
      %s348 = sphi 0, %s350
      %s351 = sphi 0, %s348
      %s352 = sphi 0, %s351
      %s368 = sphi 0, %s352
      %s374 = sphi 0, %s376
      %s377 = sphi 0, %s374
      %s378 = sphi 0, %s377
      %s394 = sphi 0, %s378
      %s400 = sphi 0, %s402
      %s403 = sphi 0, %s400
      %s404 = sphi 0, %s403
      %s420 = sphi 0, %s404
      %s426 = sphi 0, %s428
      %s429 = sphi 0, %s426
      %s430 = sphi 0, %s429
      %s446 = sphi 0, %s430
    $region4: #{tpu_custom_call.1} parent=1 // loop_header_branch
      %48 = sbr.rel (%p46) target = $region8
    $region5: #{tpu_custom_call.1} parent=1 // loop_body
      %s50 = ssub.s32 %s45, 1
      %s51 = ssub.s32 %s45, 2
      %s58 = sadd.s32 1, %s53
      %p59 = scmp.ge.s32.totalorder %s58, 2
      %s60 = scalar_select %p59, 0, %s58
      %s61 = sadd.s32 1, %s52
      %s62 = scalar_select %p59, %s61, %s52
      %p63 = scmp.ge.s32.totalorder %s62, 2
      %s64 = scalar_select %p63, 0, %s62
      %s66 = sadd.s32 %s65, 1
      %p69 = scmp.eq.s32.totalorder %s45, 3
      %p70 = scmp.ne.s32.totalorder %s65, %s67
      %p71 = scmp.eq.s32.totalorder %s45, 0
      %p72 = por %p70, %p71
      %p73 = scmp.ne.s32.totalorder %s65, %s67
      %p74 = scmp.eq.s32.totalorder %s50, 3
      %p75 = por %p73, %p74
      %p76 = scmp.ne.s32.totalorder %s67, %s68
      %p77 = scmp.eq.s32.totalorder %s50, 0
      %p78 = por %p76, %p77
      %p79 = scmp.ne.s32.totalorder %s67, %s68
      %p80 = scmp.eq.s32.totalorder %s51, 3
      %p81 = por %p79, %p80
      %p83 = scmp.ne.s32.totalorder %s68, %s82
      %p84 = scmp.eq.s32.totalorder %s51, 0
      %p85 = por %p83, %p84
      %s86 = ssub.s32 %s52, %s64
      %p87 = scmp.eq.s32.totalorder %s86, 0
      %s89 = sadd.s32 %s88, 1
      %s90 = scalar_select %p87, %s88, %s89
      %p93 = pneg %p87
      %p94 = scmp.eq.s32.totalorder %s45, 3
      %p95 = por %p93, %p94
      %p96 = scmp.ne.s32.totalorder %s88, %s91
      %p97 = scmp.eq.s32.totalorder %s45, 0
      %p98 = por %p96, %p97
      %p99 = scmp.ne.s32.totalorder %s88, %s91
      %p100 = scmp.eq.s32.totalorder %s50, 3
      %p101 = por %p99, %p100
      %p102 = scmp.ne.s32.totalorder %s91, %s92
      %p103 = scmp.eq.s32.totalorder %s50, 0
      %p104 = por %p102, %p103
      %p105 = scmp.ne.s32.totalorder %s91, %s92
      %p106 = scmp.eq.s32.totalorder %s51, 3
      %p107 = por %p105, %p106
      %p109 = scmp.ne.s32.totalorder %s92, %s108
      %p110 = scmp.eq.s32.totalorder %s51, 0
      %p111 = por %p109, %p110
      %s112 = ssub.s32 %s53, %s60
      %p113 = scmp.eq.s32.totalorder %s112, 0
      %s115 = sadd.s32 %s114, 1
      %s116 = scalar_select %p113, %s114, %s115
      %p119 = pneg %p113
      %p120 = scmp.eq.s32.totalorder %s45, 3
      %p121 = por %p119, %p120
      %p122 = scmp.ne.s32.totalorder %s114, %s117
      %p123 = scmp.eq.s32.totalorder %s45, 0
      %p124 = por %p122, %p123
      %p125 = scmp.ne.s32.totalorder %s114, %s117
      %p126 = scmp.eq.s32.totalorder %s50, 3
      %p127 = por %p125, %p126
      %p128 = scmp.ne.s32.totalorder %s117, %s118
      %p129 = scmp.eq.s32.totalorder %s50, 0
      %p130 = por %p128, %p129
      %p131 = scmp.ne.s32.totalorder %s117, %s118
      %p132 = scmp.eq.s32.totalorder %s51, 3
      %p133 = por %p131, %p132
      %p135 = scmp.ne.s32.totalorder %s118, %s134
      %p136 = scmp.eq.s32.totalorder %s51, 0
      %p137 = por %p135, %p136
      %s138 = ssub.s32 %s53, %s60
      %p139 = scmp.eq.s32.totalorder %s138, 0
      %s141 = sadd.s32 %s140, 1
      %s142 = scalar_select %p139, %s140, %s141
      %p145 = pneg %p139
      %p146 = scmp.eq.s32.totalorder %s45, 3
      %p147 = por %p145, %p146
      %p148 = scmp.ne.s32.totalorder %s140, %s143
      %p149 = scmp.eq.s32.totalorder %s45, 0
      %p150 = por %p148, %p149
      %p151 = scmp.ne.s32.totalorder %s140, %s143
      %p152 = scmp.eq.s32.totalorder %s50, 3
      %p153 = por %p151, %p152
      %p154 = scmp.ne.s32.totalorder %s143, %s144
      %p155 = scmp.eq.s32.totalorder %s50, 0
      %p156 = por %p154, %p155
      %p157 = scmp.ne.s32.totalorder %s143, %s144
      %p158 = scmp.eq.s32.totalorder %s51, 3
      %p159 = por %p157, %p158
      %p161 = scmp.ne.s32.totalorder %s144, %s160
      %p162 = scmp.eq.s32.totalorder %s51, 0
      %p163 = por %p161, %p162
      %s164 = ssub.s32 %s53, %s60
      %p165 = scmp.eq.s32.totalorder %s164, 0
      %s167 = sadd.s32 %s166, 1
      %s168 = scalar_select %p165, %s166, %s167
      %p171 = pneg %p165
      %p172 = scmp.eq.s32.totalorder %s45, 3
      %p173 = por %p171, %p172
      %p174 = scmp.ne.s32.totalorder %s166, %s169
      %p175 = scmp.eq.s32.totalorder %s45, 0
      %p176 = por %p174, %p175
      %p177 = scmp.ne.s32.totalorder %s166, %s169
      %p178 = scmp.eq.s32.totalorder %s50, 3
      %p179 = por %p177, %p178
      %p180 = scmp.ne.s32.totalorder %s169, %s170
      %p181 = scmp.eq.s32.totalorder %s50, 0
      %p182 = por %p180, %p181
      %p183 = scmp.ne.s32.totalorder %s169, %s170
      %p184 = scmp.eq.s32.totalorder %s51, 3
      %p185 = por %p183, %p184
      %p187 = scmp.ne.s32.totalorder %s170, %s186
      %p188 = scmp.eq.s32.totalorder %s51, 0
      %p189 = por %p187, %p188
      %s190 = ssub.s32 %s53, %s60
      %p191 = scmp.eq.s32.totalorder %s190, 0
      %s193 = sadd.s32 %s192, 1
      %s194 = scalar_select %p191, %s192, %s193
      %p197 = pneg %p191
      %p198 = scmp.eq.s32.totalorder %s45, 3
      %p199 = por %p197, %p198
      %p200 = scmp.ne.s32.totalorder %s192, %s195
      %p201 = scmp.eq.s32.totalorder %s45, 0
      %p202 = por %p200, %p201
      %p203 = scmp.ne.s32.totalorder %s192, %s195
      %p204 = scmp.eq.s32.totalorder %s50, 3
      %p205 = por %p203, %p204
      %p206 = scmp.ne.s32.totalorder %s195, %s196
      %p207 = scmp.eq.s32.totalorder %s50, 0
      %p208 = por %p206, %p207
      %p209 = scmp.ne.s32.totalorder %s195, %s196
      %p210 = scmp.eq.s32.totalorder %s51, 3
      %p211 = por %p209, %p210
      %p213 = scmp.ne.s32.totalorder %s196, %s212
      %p214 = scmp.eq.s32.totalorder %s51, 0
      %p215 = por %p213, %p214
      %s216 = ssub.s32 %s53, %s60
      %p217 = scmp.eq.s32.totalorder %s216, 0
      %s219 = sadd.s32 %s218, 1
      %s220 = scalar_select %p217, %s218, %s219
      %p223 = pneg %p217
      %p224 = scmp.eq.s32.totalorder %s45, 3
      %p225 = por %p223, %p224
      %p226 = scmp.ne.s32.totalorder %s218, %s221
      %p227 = scmp.eq.s32.totalorder %s45, 0
      %p228 = por %p226, %p227
      %p229 = scmp.ne.s32.totalorder %s218, %s221
      %p230 = scmp.eq.s32.totalorder %s50, 3
      %p231 = por %p229, %p230
      %p232 = scmp.ne.s32.totalorder %s221, %s222
      %p233 = scmp.eq.s32.totalorder %s50, 0
      %p234 = por %p232, %p233
      %p235 = scmp.ne.s32.totalorder %s221, %s222
      %p236 = scmp.eq.s32.totalorder %s51, 3
      %p237 = por %p235, %p236
      %p239 = scmp.ne.s32.totalorder %s222, %s238
      %p240 = scmp.eq.s32.totalorder %s51, 0
      %p241 = por %p239, %p240
      %s242 = ssub.s32 %s53, %s60
      %p243 = scmp.eq.s32.totalorder %s242, 0
      %s245 = sadd.s32 %s244, 1
      %s246 = scalar_select %p243, %s244, %s245
      %p249 = pneg %p243
      %p250 = scmp.eq.s32.totalorder %s45, 3
      %p251 = por %p249, %p250
      %p252 = scmp.ne.s32.totalorder %s244, %s247
      %p253 = scmp.eq.s32.totalorder %s45, 0
      %p254 = por %p252, %p253
      %p255 = scmp.ne.s32.totalorder %s244, %s247
      %p256 = scmp.eq.s32.totalorder %s50, 3
      %p257 = por %p255, %p256
      %p258 = scmp.ne.s32.totalorder %s247, %s248
      %p259 = scmp.eq.s32.totalorder %s50, 0
      %p260 = por %p258, %p259
      %p261 = scmp.ne.s32.totalorder %s247, %s248
      %p262 = scmp.eq.s32.totalorder %s51, 3
      %p263 = por %p261, %p262
      %p265 = scmp.ne.s32.totalorder %s248, %s264
      %p266 = scmp.eq.s32.totalorder %s51, 0
      %p267 = por %p265, %p266
      %s268 = ssub.s32 %s53, %s60
      %p269 = scmp.eq.s32.totalorder %s268, 0
      %s271 = sadd.s32 %s270, 1
      %s272 = scalar_select %p269, %s270, %s271
      %p275 = pneg %p269
      %p276 = scmp.eq.s32.totalorder %s45, 3
      %p277 = por %p275, %p276
      %p278 = scmp.ne.s32.totalorder %s270, %s273
      %p279 = scmp.eq.s32.totalorder %s45, 0
      %p280 = por %p278, %p279
      %p281 = scmp.ne.s32.totalorder %s270, %s273
      %p282 = scmp.eq.s32.totalorder %s50, 3
      %p283 = por %p281, %p282
      %p284 = scmp.ne.s32.totalorder %s273, %s274
      %p285 = scmp.eq.s32.totalorder %s50, 0
      %p286 = por %p284, %p285
      %p287 = scmp.ne.s32.totalorder %s273, %s274
      %p288 = scmp.eq.s32.totalorder %s51, 3
      %p289 = por %p287, %p288
      %p291 = scmp.ne.s32.totalorder %s274, %s290
      %p292 = scmp.eq.s32.totalorder %s51, 0
      %p293 = por %p291, %p292
      %s294 = ssub.s32 %s53, %s60
      %p295 = scmp.eq.s32.totalorder %s294, 0
      %s297 = sadd.s32 %s296, 1
      %s298 = scalar_select %p295, %s296, %s297
      %p301 = pneg %p295
      %p302 = scmp.eq.s32.totalorder %s45, 3
      %p303 = por %p301, %p302
      %p304 = scmp.ne.s32.totalorder %s296, %s299
      %p305 = scmp.eq.s32.totalorder %s45, 0
      %p306 = por %p304, %p305
      %p307 = scmp.ne.s32.totalorder %s296, %s299
      %p308 = scmp.eq.s32.totalorder %s50, 3
      %p309 = por %p307, %p308
      %p310 = scmp.ne.s32.totalorder %s299, %s300
      %p311 = scmp.eq.s32.totalorder %s50, 0
      %p312 = por %p310, %p311
      %p313 = scmp.ne.s32.totalorder %s299, %s300
      %p314 = scmp.eq.s32.totalorder %s51, 3
      %p315 = por %p313, %p314
      %p317 = scmp.ne.s32.totalorder %s300, %s316
      %p318 = scmp.eq.s32.totalorder %s51, 0
      %p319 = por %p317, %p318
      %s320 = ssub.s32 %s53, %s60
      %p321 = scmp.eq.s32.totalorder %s320, 0
      %s323 = sadd.s32 %s322, 1
      %s324 = scalar_select %p321, %s322, %s323
      %p327 = pneg %p321
      %p328 = scmp.eq.s32.totalorder %s45, 3
      %p329 = por %p327, %p328
      %p330 = scmp.ne.s32.totalorder %s322, %s325
      %p331 = scmp.eq.s32.totalorder %s45, 0
      %p332 = por %p330, %p331
      %p333 = scmp.ne.s32.totalorder %s322, %s325
      %p334 = scmp.eq.s32.totalorder %s50, 3
      %p335 = por %p333, %p334
      %p336 = scmp.ne.s32.totalorder %s325, %s326
      %p337 = scmp.eq.s32.totalorder %s50, 0
      %p338 = por %p336, %p337
      %p339 = scmp.ne.s32.totalorder %s325, %s326
      %p340 = scmp.eq.s32.totalorder %s51, 3
      %p341 = por %p339, %p340
      %p343 = scmp.ne.s32.totalorder %s326, %s342
      %p344 = scmp.eq.s32.totalorder %s51, 0
      %p345 = por %p343, %p344
      %s346 = ssub.s32 %s53, %s60
      %p347 = scmp.eq.s32.totalorder %s346, 0
      %s349 = sadd.s32 %s348, 1
      %s350 = scalar_select %p347, %s348, %s349
      %p353 = pneg %p347
      %p354 = scmp.eq.s32.totalorder %s45, 3
      %p355 = por %p353, %p354
      %p356 = scmp.ne.s32.totalorder %s348, %s351
      %p357 = scmp.eq.s32.totalorder %s45, 0
      %p358 = por %p356, %p357
      %p359 = scmp.ne.s32.totalorder %s348, %s351
      %p360 = scmp.eq.s32.totalorder %s50, 3
      %p361 = por %p359, %p360
      %p362 = scmp.ne.s32.totalorder %s351, %s352
      %p363 = scmp.eq.s32.totalorder %s50, 0
      %p364 = por %p362, %p363
      %p365 = scmp.ne.s32.totalorder %s351, %s352
      %p366 = scmp.eq.s32.totalorder %s51, 3
      %p367 = por %p365, %p366
      %p369 = scmp.ne.s32.totalorder %s352, %s368
      %p370 = scmp.eq.s32.totalorder %s51, 0
      %p371 = por %p369, %p370
      %s372 = ssub.s32 %s53, %s60
      %p373 = scmp.eq.s32.totalorder %s372, 0
      %s375 = sadd.s32 %s374, 1
      %s376 = scalar_select %p373, %s374, %s375
      %p379 = pneg %p373
      %p380 = scmp.eq.s32.totalorder %s45, 3
      %p381 = por %p379, %p380
      %p382 = scmp.ne.s32.totalorder %s374, %s377
      %p383 = scmp.eq.s32.totalorder %s45, 0
      %p384 = por %p382, %p383
      %p385 = scmp.ne.s32.totalorder %s374, %s377
      %p386 = scmp.eq.s32.totalorder %s50, 3
      %p387 = por %p385, %p386
      %p388 = scmp.ne.s32.totalorder %s377, %s378
      %p389 = scmp.eq.s32.totalorder %s50, 0
      %p390 = por %p388, %p389
      %p391 = scmp.ne.s32.totalorder %s377, %s378
      %p392 = scmp.eq.s32.totalorder %s51, 3
      %p393 = por %p391, %p392
      %p395 = scmp.ne.s32.totalorder %s378, %s394
      %p396 = scmp.eq.s32.totalorder %s51, 0
      %p397 = por %p395, %p396
      %s398 = ssub.s32 %s53, %s60
      %p399 = scmp.eq.s32.totalorder %s398, 0
      %s401 = sadd.s32 %s400, 1
      %s402 = scalar_select %p399, %s400, %s401
      %p405 = pneg %p399
      %p406 = scmp.eq.s32.totalorder %s45, 3
      %p407 = por %p405, %p406
      %p408 = scmp.ne.s32.totalorder %s400, %s403
      %p409 = scmp.eq.s32.totalorder %s45, 0
      %p410 = por %p408, %p409
      %p411 = scmp.ne.s32.totalorder %s400, %s403
      %p412 = scmp.eq.s32.totalorder %s50, 3
      %p413 = por %p411, %p412
      %p414 = scmp.ne.s32.totalorder %s403, %s404
      %p415 = scmp.eq.s32.totalorder %s50, 0
      %p416 = por %p414, %p415
      %p417 = scmp.ne.s32.totalorder %s403, %s404
      %p418 = scmp.eq.s32.totalorder %s51, 3
      %p419 = por %p417, %p418
      %p421 = scmp.ne.s32.totalorder %s404, %s420
      %p422 = scmp.eq.s32.totalorder %s51, 0
      %p423 = por %p421, %p422
      %s424 = ssub.s32 %s52, %s64
      %p425 = scmp.eq.s32.totalorder %s424, 0
      %s427 = sadd.s32 %s426, 1
      %s428 = scalar_select %p425, %s426, %s427
      %p431 = pneg %p425
      %p432 = scmp.eq.s32.totalorder %s45, 3
      %p433 = por %p431, %p432
      %p434 = scmp.ne.s32.totalorder %s426, %s429
      %p435 = scmp.eq.s32.totalorder %s45, 0
      %p436 = por %p434, %p435
      %p437 = scmp.ne.s32.totalorder %s426, %s429
      %p438 = scmp.eq.s32.totalorder %s50, 3
      %p439 = por %p437, %p438
      %p440 = scmp.ne.s32.totalorder %s429, %s430
      %p441 = scmp.eq.s32.totalorder %s50, 0
      %p442 = por %p440, %p441
      %p443 = scmp.ne.s32.totalorder %s429, %s430
      %p444 = scmp.eq.s32.totalorder %s51, 3
      %p445 = por %p443, %p444
      %p447 = scmp.ne.s32.totalorder %s430, %s446
      %p448 = scmp.eq.s32.totalorder %s51, 0
      %p449 = por %p447, %p448
      %p450 = scmp.le.s32.totalorder 1, %s45
      %p451 = scmp.lt.s32.totalorder %s45, 5
      %p452 = pnand %p450, %p451
      %p453 = pneg %p452
      // Predicated region
      $region9: #{tpu_custom_call.1} parent=5 // pred_check
        _
      $region10: #{tpu_custom_call.1} parent=5 // pred_check_branch
        %455 = sbr.rel (%p452) target = $region12
      $region11: #{tpu_custom_call.1} parent=5 // pred_region
        %s456 = ssub.s32 %s45, 1
        // Predicated region
        $region13: #{tpu_custom_call.1} parent=11 // pred_check
          %p457 = pneg %p78
        $region14: #{tpu_custom_call.1} parent=11 // pred_check_branch
          %459 = sbr.rel (%p457) target = $region16
        $region15: #{tpu_custom_call.1} parent=11 // pred_region
          %s461 = ssub.s32 128, 128
          %462 = vsyncadd [#allocation4], %s461
          %s464 = sshll.u32 [#allocation3], 4
          %s465 = int_to_ptr.vmem [resolvable:$true] %s464
          %467 = dma.hbm_to_vmem [thread:$0]  %s0, 128, %s465, [#allocation4]
        $region16: #{tpu_custom_call.1} parent=11 // pred_fallthru
          _
      $region12: #{tpu_custom_call.1} parent=5 // pred_fallthru
        _
      %p468 = scmp.lt.s32.totalorder %s45, 4
      // Predicated region
      $region17: #{tpu_custom_call.1} parent=5 // pred_check
        %p469 = pneg %p468
      $region18: #{tpu_custom_call.1} parent=5 // pred_check_branch
        %471 = sbr.rel (%p469) target = $region20
      $region19: #{tpu_custom_call.1} parent=5 // pred_region
        // Predicated region
        $region21: #{tpu_custom_call.1} parent=19 // pred_check
          %p472 = pneg %p98
        $region22: #{tpu_custom_call.1} parent=19 // pred_check_branch
          %474 = sbr.rel (%p472) target = $region24
        $region23: #{tpu_custom_call.1} parent=19 // pred_region
          %s475 = sand.u32 %s45, 1
          %s476 = scalar_lea.sflag [#allocation7], %s475
          %s477 = sand.u32 %s88, 1
          %s478 = smul.addr %s477, 8
          %s479 = scalar_lea.vmem [#allocation6], %s478
          %s481 = ssub.s32 128, 128
          %482 = vsyncadd %s476, %s481
          %s483 = smul.addr %s52, 128
          %s484 = scalar_lea.hbm %s1, %s483
          %s486 = sshll.u32 %s479, 4
          %s487 = int_to_ptr.vmem [resolvable:$true] %s486
          %489 = dma.hbm_to_vmem [thread:$0]  %s484, 128, %s487, %s476
        $region24: #{tpu_custom_call.1} parent=19 // pred_fallthru
          _
        // Predicated region
        $region25: #{tpu_custom_call.1} parent=19 // pred_check
          %p490 = pneg %p124
        $region26: #{tpu_custom_call.1} parent=19 // pred_check_branch
          %492 = sbr.rel (%p490) target = $region28
        $region27: #{tpu_custom_call.1} parent=19 // pred_region
          %s493 = sand.u32 %s45, 1
          %s494 = scalar_lea.sflag [#allocation7], %s493
          %s495 = sand.u32 %s114, 1
          %s496 = scalar_lea.vmem [#allocation8], %s495
          %s498 = ssub.s32 16, 16
          %499 = vsyncadd %s494, %s498
          %s500 = smul.addr %s53, 16
          %s501 = scalar_lea.hbm %s2, %s500
          %s503 = sshll.u32 %s496, 4
          %s504 = int_to_ptr.vmem [resolvable:$true] %s503
          %506 = dma.hbm_to_vmem [thread:$0]  %s501, 16, %s504, %s494
        $region28: #{tpu_custom_call.1} parent=19 // pred_fallthru
          _
        // Predicated region
        $region29: #{tpu_custom_call.1} parent=19 // pred_check
          %p507 = pneg %p150
        $region30: #{tpu_custom_call.1} parent=19 // pred_check_branch
          %509 = sbr.rel (%p507) target = $region32
        $region31: #{tpu_custom_call.1} parent=19 // pred_region
          %s510 = sand.u32 %s45, 1
          %s511 = scalar_lea.sflag [#allocation10], %s510
          %s512 = sand.u32 %s140, 1
          %s513 = scalar_lea.vmem [#allocation9], %s512
          %s515 = ssub.s32 16, 16
          %516 = vsyncadd %s511, %s515
          %s517 = smul.addr %s53, 16
          %s518 = scalar_lea.hbm %s3, %s517
          %s520 = sshll.u32 %s513, 4
          %s521 = int_to_ptr.vmem [resolvable:$true] %s520
          %523 = dma.hbm_to_vmem [thread:$0]  %s518, 16, %s521, %s511
        $region32: #{tpu_custom_call.1} parent=19 // pred_fallthru
          _
        // Predicated region
        $region33: #{tpu_custom_call.1} parent=19 // pred_check
          %p524 = pneg %p176
        $region34: #{tpu_custom_call.1} parent=19 // pred_check_branch
          %526 = sbr.rel (%p524) target = $region36
        $region35: #{tpu_custom_call.1} parent=19 // pred_region
          %s527 = sand.u32 %s45, 1
          %s528 = scalar_lea.sflag [#allocation10], %s527
          %s529 = sand.u32 %s166, 1
          %s530 = smul.addr %s529, 16
          %s531 = scalar_lea.vmem [#allocation11], %s530
          %s533 = ssub.s32 256, 256
          %534 = vsyncadd %s528, %s533
          %s535 = smul.addr %s53, 4
          %s536 = smul.addr %s535, 64
          %s537 = scalar_lea.hbm %s4, %s536
          %s538 = sshll.u32 %s531, 4
          %s539 = int_to_ptr.vmem [resolvable:$true] %s538
          %544 = dma.hbm_to_vmem [thread:$0]  %s537, 256, %s539, %s528, 64, 64, 4
        $region36: #{tpu_custom_call.1} parent=19 // pred_fallthru
          _
        // Predicated region
        $region37: #{tpu_custom_call.1} parent=19 // pred_check
          %p545 = pneg %p202
        $region38: #{tpu_custom_call.1} parent=19 // pred_check_branch
          %547 = sbr.rel (%p545) target = $region40
        $region39: #{tpu_custom_call.1} parent=19 // pred_region
          %s548 = sand.u32 %s45, 1
          %s549 = scalar_lea.sflag [#allocation13], %s548
          %s550 = sand.u32 %s192, 1
          %s551 = scalar_lea.vmem [#allocation12], %s550
          %s553 = ssub.s32 16, 16
          %554 = vsyncadd %s549, %s553
          %s555 = smul.addr %s53, 16
          %s556 = scalar_lea.hbm %s5, %s555
          %s558 = sshll.u32 %s551, 4
          %s559 = int_to_ptr.vmem [resolvable:$true] %s558
          %561 = dma.hbm_to_vmem [thread:$0]  %s556, 16, %s559, %s549
        $region40: #{tpu_custom_call.1} parent=19 // pred_fallthru
          _
        // Predicated region
        $region41: #{tpu_custom_call.1} parent=19 // pred_check
          %p562 = pneg %p228
        $region42: #{tpu_custom_call.1} parent=19 // pred_check_branch
          %564 = sbr.rel (%p562) target = $region44
        $region43: #{tpu_custom_call.1} parent=19 // pred_region
          %s565 = sand.u32 %s45, 1
          %s566 = scalar_lea.sflag [#allocation13], %s565
          %s567 = sand.u32 %s218, 1
          %s568 = smul.addr %s567, 16
          %s569 = scalar_lea.vmem [#allocation14], %s568
          %s571 = ssub.s32 256, 256
          %572 = vsyncadd %s566, %s571
          %s573 = smul.addr %s53, 4
          %s574 = smul.addr %s573, 64
          %s575 = scalar_lea.hbm %s6, %s574
          %s576 = sshll.u32 %s569, 4
          %s577 = int_to_ptr.vmem [resolvable:$true] %s576
          %582 = dma.hbm_to_vmem [thread:$0]  %s575, 256, %s577, %s566, 64, 64, 4
        $region44: #{tpu_custom_call.1} parent=19 // pred_fallthru
          _
        // Predicated region
        $region45: #{tpu_custom_call.1} parent=19 // pred_check
          %p583 = pneg %p254
        $region46: #{tpu_custom_call.1} parent=19 // pred_check_branch
          %585 = sbr.rel (%p583) target = $region48
        $region47: #{tpu_custom_call.1} parent=19 // pred_region
          %s586 = sand.u32 %s45, 1
          %s587 = scalar_lea.sflag [#allocation16], %s586
          %s588 = sand.u32 %s244, 1
          %s589 = scalar_lea.vmem [#allocation15], %s588
          %s591 = ssub.s32 16, 16
          %592 = vsyncadd %s587, %s591
          %s593 = smul.addr %s53, 16
          %s594 = scalar_lea.hbm %s7, %s593
          %s596 = sshll.u32 %s589, 4
          %s597 = int_to_ptr.vmem [resolvable:$true] %s596
          %599 = dma.hbm_to_vmem [thread:$0]  %s594, 16, %s597, %s587
        $region48: #{tpu_custom_call.1} parent=19 // pred_fallthru
          _
        // Predicated region
        $region49: #{tpu_custom_call.1} parent=19 // pred_check
          %p600 = pneg %p280
        $region50: #{tpu_custom_call.1} parent=19 // pred_check_branch
          %602 = sbr.rel (%p600) target = $region52
        $region51: #{tpu_custom_call.1} parent=19 // pred_region
          %s603 = sand.u32 %s45, 1
          %s604 = scalar_lea.sflag [#allocation16], %s603
          %s605 = sand.u32 %s270, 1
          %s606 = scalar_lea.vmem [#allocation17], %s605
          %s608 = ssub.s32 16, 16
          %609 = vsyncadd %s604, %s608
          %s610 = smul.addr %s53, 16
          %s611 = scalar_lea.hbm %s8, %s610
          %s613 = sshll.u32 %s606, 4
          %s614 = int_to_ptr.vmem [resolvable:$true] %s613
          %616 = dma.hbm_to_vmem [thread:$0]  %s611, 16, %s614, %s604
        $region52: #{tpu_custom_call.1} parent=19 // pred_fallthru
          _
        // Predicated region
        $region53: #{tpu_custom_call.1} parent=19 // pred_check
          %p617 = pneg %p306
        $region54: #{tpu_custom_call.1} parent=19 // pred_check_branch
          %619 = sbr.rel (%p617) target = $region56
        $region55: #{tpu_custom_call.1} parent=19 // pred_region
          %s620 = sand.u32 %s45, 1
          %s621 = scalar_lea.sflag [#allocation19], %s620
          %s622 = sand.u32 %s296, 1
          %s623 = scalar_lea.vmem [#allocation18], %s622
          %s625 = ssub.s32 16, 16
          %626 = vsyncadd %s621, %s625
          %s627 = smul.addr %s53, 16
          %s628 = scalar_lea.hbm %s9, %s627
          %s630 = sshll.u32 %s623, 4
          %s631 = int_to_ptr.vmem [resolvable:$true] %s630
          %633 = dma.hbm_to_vmem [thread:$0]  %s628, 16, %s631, %s621
        $region56: #{tpu_custom_call.1} parent=19 // pred_fallthru
          _
        // Predicated region
        $region57: #{tpu_custom_call.1} parent=19 // pred_check
          %p634 = pneg %p332
        $region58: #{tpu_custom_call.1} parent=19 // pred_check_branch
          %636 = sbr.rel (%p634) target = $region60
        $region59: #{tpu_custom_call.1} parent=19 // pred_region
          %s637 = sand.u32 %s45, 1
          %s638 = scalar_lea.sflag [#allocation19], %s637
          %s639 = sand.u32 %s322, 1
          %s640 = smul.addr %s639, 16
          %s641 = scalar_lea.vmem [#allocation20], %s640
          %s643 = ssub.s32 256, 256
          %644 = vsyncadd %s638, %s643
          %s645 = smul.addr %s53, 4
          %s646 = smul.addr %s645, 64
          %s647 = scalar_lea.hbm %s10, %s646
          %s648 = sshll.u32 %s641, 4
          %s649 = int_to_ptr.vmem [resolvable:$true] %s648
          %654 = dma.hbm_to_vmem [thread:$0]  %s647, 256, %s649, %s638, 64, 64, 4
        $region60: #{tpu_custom_call.1} parent=19 // pred_fallthru
          _
        // Predicated region
        $region61: #{tpu_custom_call.1} parent=19 // pred_check
          %p655 = pneg %p358
        $region62: #{tpu_custom_call.1} parent=19 // pred_check_branch
          %657 = sbr.rel (%p655) target = $region64
        $region63: #{tpu_custom_call.1} parent=19 // pred_region
          %s658 = sand.u32 %s45, 1
          %s659 = scalar_lea.sflag [#allocation22], %s658
          %s660 = sand.u32 %s348, 1
          %s661 = scalar_lea.vmem [#allocation21], %s660
          %s663 = ssub.s32 16, 16
          %664 = vsyncadd %s659, %s663
          %s665 = smul.addr %s53, 16
          %s666 = scalar_lea.hbm %s11, %s665
          %s668 = sshll.u32 %s661, 4
          %s669 = int_to_ptr.vmem [resolvable:$true] %s668
          %671 = dma.hbm_to_vmem [thread:$0]  %s666, 16, %s669, %s659
        $region64: #{tpu_custom_call.1} parent=19 // pred_fallthru
          _
        // Predicated region
        $region65: #{tpu_custom_call.1} parent=19 // pred_check
          %p672 = pneg %p384
        $region66: #{tpu_custom_call.1} parent=19 // pred_check_branch
          %674 = sbr.rel (%p672) target = $region68
        $region67: #{tpu_custom_call.1} parent=19 // pred_region
          %s675 = sand.u32 %s45, 1
          %s676 = scalar_lea.sflag [#allocation22], %s675
          %s677 = sand.u32 %s374, 1
          %s678 = smul.addr %s677, 64
          %s679 = scalar_lea.vmem [#allocation23], %s678
          %s681 = ssub.s32 1024, 1024
          %682 = vsyncadd %s676, %s681
          %s683 = smul.addr %s53, 16
          %s684 = smul.addr %s683, 64
          %s685 = scalar_lea.hbm %s12, %s684
          %s686 = sshll.u32 %s679, 4
          %s687 = int_to_ptr.vmem [resolvable:$true] %s686
          %692 = dma.hbm_to_vmem [thread:$0]  %s685, 1024, %s687, %s676, 64, 64, 4
        $region68: #{tpu_custom_call.1} parent=19 // pred_fallthru
          _
        // Predicated region
        $region69: #{tpu_custom_call.1} parent=19 // pred_check
          %p693 = pneg %p410
        $region70: #{tpu_custom_call.1} parent=19 // pred_check_branch
          %695 = sbr.rel (%p693) target = $region72
        $region71: #{tpu_custom_call.1} parent=19 // pred_region
          %s696 = sand.u32 %s400, 1
          %s697 = scalar_lea.sflag [#allocation25], %s696
          %s698 = sand.u32 %s400, 1
          %s699 = scalar_lea.vmem [#allocation24], %s698
          %s701 = ssub.s32 16, 16
          %702 = vsyncadd %s697, %s701
          %s703 = smul.addr %s53, 16
          %s704 = scalar_lea.hbm %s13, %s703
          %s706 = sshll.u32 %s699, 4
          %s707 = int_to_ptr.vmem [resolvable:$true] %s706
          %709 = dma.hbm_to_vmem [thread:$0]  %s704, 16, %s707, %s697
        $region72: #{tpu_custom_call.1} parent=19 // pred_fallthru
          _
      $region20: #{tpu_custom_call.1} parent=5 // pred_fallthru
        _
      %p710 = scmp.le.s32.totalorder 1, %s45
      %p711 = scmp.lt.s32.totalorder %s45, 5
      %p712 = pnand %p710, %p711
      %p713 = pneg %p712
      // Predicated region
      $region73: #{tpu_custom_call.1} parent=5 // pred_check
        _
      $region74: #{tpu_custom_call.1} parent=5 // pred_check_branch
        %715 = sbr.rel (%p712) target = $region76
      $region75: #{tpu_custom_call.1} parent=5 // pred_region
        %s716 = ssub.s32 %s45, 1
        // Predicated region
        $region77: #{tpu_custom_call.1} parent=75 // pred_check
          %p717 = pneg %p78
        $region78: #{tpu_custom_call.1} parent=75 // pred_check_branch
          %719 = sbr.rel (%p717) target = $region80
        $region79: #{tpu_custom_call.1} parent=75 // pred_region
          %720 = dma.done [#allocation4], 128
        $region80: #{tpu_custom_call.1} parent=75 // pred_fallthru
          _
        %s721 = sand.u32 %s50, 1
        %s722 = scalar_lea.sflag [#allocation7], %s721
        %s723 = sand.u32 %s91, 1
        %s724 = smul.addr %s723, 8
        %s725 = scalar_lea.vmem [#allocation6], %s724
        // Predicated region
        $region81: #{tpu_custom_call.1} parent=75 // pred_check
          %p726 = pneg %p104
        $region82: #{tpu_custom_call.1} parent=75 // pred_check_branch
          %728 = sbr.rel (%p726) target = $region84
        $region83: #{tpu_custom_call.1} parent=75 // pred_region
          %729 = dma.done %s722, 128
        $region84: #{tpu_custom_call.1} parent=75 // pred_fallthru
          _
        %s730 = sand.u32 %s50, 1
        %s731 = scalar_lea.sflag [#allocation7], %s730
        %s732 = sand.u32 %s117, 1
        %s733 = scalar_lea.vmem [#allocation8], %s732
        // Predicated region
        $region85: #{tpu_custom_call.1} parent=75 // pred_check
          %p734 = pneg %p130
        $region86: #{tpu_custom_call.1} parent=75 // pred_check_branch
          %736 = sbr.rel (%p734) target = $region88
        $region87: #{tpu_custom_call.1} parent=75 // pred_region
          %737 = dma.done %s731, 16
        $region88: #{tpu_custom_call.1} parent=75 // pred_fallthru
          _
        %s738 = sand.u32 %s50, 1
        %s739 = scalar_lea.sflag [#allocation10], %s738
        %s740 = sand.u32 %s143, 1
        %s741 = scalar_lea.vmem [#allocation9], %s740
        // Predicated region
        $region89: #{tpu_custom_call.1} parent=75 // pred_check
          %p742 = pneg %p156
        $region90: #{tpu_custom_call.1} parent=75 // pred_check_branch
          %744 = sbr.rel (%p742) target = $region92
        $region91: #{tpu_custom_call.1} parent=75 // pred_region
          %745 = dma.done %s739, 16
        $region92: #{tpu_custom_call.1} parent=75 // pred_fallthru
          _
        %s746 = sand.u32 %s50, 1
        %s747 = scalar_lea.sflag [#allocation10], %s746
        %s748 = sand.u32 %s169, 1
        %s749 = smul.addr %s748, 16
        %s750 = scalar_lea.vmem [#allocation11], %s749
        // Predicated region
        $region93: #{tpu_custom_call.1} parent=75 // pred_check
          %p751 = pneg %p182
        $region94: #{tpu_custom_call.1} parent=75 // pred_check_branch
          %753 = sbr.rel (%p751) target = $region96
        $region95: #{tpu_custom_call.1} parent=75 // pred_region
          %754 = dma.done %s747, 256
        $region96: #{tpu_custom_call.1} parent=75 // pred_fallthru
          _
        %s755 = sand.u32 %s50, 1
        %s756 = scalar_lea.sflag [#allocation13], %s755
        %s757 = sand.u32 %s195, 1
        %s758 = scalar_lea.vmem [#allocation12], %s757
        // Predicated region
        $region97: #{tpu_custom_call.1} parent=75 // pred_check
          %p759 = pneg %p208
        $region98: #{tpu_custom_call.1} parent=75 // pred_check_branch
          %761 = sbr.rel (%p759) target = $region100
        $region99: #{tpu_custom_call.1} parent=75 // pred_region
          %762 = dma.done %s756, 16
        $region100: #{tpu_custom_call.1} parent=75 // pred_fallthru
          _
        %s763 = sand.u32 %s50, 1
        %s764 = scalar_lea.sflag [#allocation13], %s763
        %s765 = sand.u32 %s221, 1
        %s766 = smul.addr %s765, 16
        %s767 = scalar_lea.vmem [#allocation14], %s766
        // Predicated region
        $region101: #{tpu_custom_call.1} parent=75 // pred_check
          %p768 = pneg %p234
        $region102: #{tpu_custom_call.1} parent=75 // pred_check_branch
          %770 = sbr.rel (%p768) target = $region104
        $region103: #{tpu_custom_call.1} parent=75 // pred_region
          %771 = dma.done %s764, 256
        $region104: #{tpu_custom_call.1} parent=75 // pred_fallthru
          _
        %s772 = sand.u32 %s50, 1
        %s773 = scalar_lea.sflag [#allocation16], %s772
        %s774 = sand.u32 %s247, 1
        %s775 = scalar_lea.vmem [#allocation15], %s774
        // Predicated region
        $region105: #{tpu_custom_call.1} parent=75 // pred_check
          %p776 = pneg %p260
        $region106: #{tpu_custom_call.1} parent=75 // pred_check_branch
          %778 = sbr.rel (%p776) target = $region108
        $region107: #{tpu_custom_call.1} parent=75 // pred_region
          %779 = dma.done %s773, 16
        $region108: #{tpu_custom_call.1} parent=75 // pred_fallthru
          _
        %s780 = sand.u32 %s50, 1
        %s781 = scalar_lea.sflag [#allocation16], %s780
        %s782 = sand.u32 %s273, 1
        %s783 = scalar_lea.vmem [#allocation17], %s782
        // Predicated region
        $region109: #{tpu_custom_call.1} parent=75 // pred_check
          %p784 = pneg %p286
        $region110: #{tpu_custom_call.1} parent=75 // pred_check_branch
          %786 = sbr.rel (%p784) target = $region112
        $region111: #{tpu_custom_call.1} parent=75 // pred_region
          %787 = dma.done %s781, 16
        $region112: #{tpu_custom_call.1} parent=75 // pred_fallthru
          _
        %s788 = sand.u32 %s50, 1
        %s789 = scalar_lea.sflag [#allocation19], %s788
        %s790 = sand.u32 %s299, 1
        %s791 = scalar_lea.vmem [#allocation18], %s790
        // Predicated region
        $region113: #{tpu_custom_call.1} parent=75 // pred_check
          %p792 = pneg %p312
        $region114: #{tpu_custom_call.1} parent=75 // pred_check_branch
          %794 = sbr.rel (%p792) target = $region116
        $region115: #{tpu_custom_call.1} parent=75 // pred_region
          %795 = dma.done %s789, 16
        $region116: #{tpu_custom_call.1} parent=75 // pred_fallthru
          _
        %s796 = sand.u32 %s50, 1
        %s797 = scalar_lea.sflag [#allocation19], %s796
        %s798 = sand.u32 %s325, 1
        %s799 = smul.addr %s798, 16
        %s800 = scalar_lea.vmem [#allocation20], %s799
        // Predicated region
        $region117: #{tpu_custom_call.1} parent=75 // pred_check
          %p801 = pneg %p338
        $region118: #{tpu_custom_call.1} parent=75 // pred_check_branch
          %803 = sbr.rel (%p801) target = $region120
        $region119: #{tpu_custom_call.1} parent=75 // pred_region
          %804 = dma.done %s797, 256
        $region120: #{tpu_custom_call.1} parent=75 // pred_fallthru
          _
        %s805 = sand.u32 %s50, 1
        %s806 = scalar_lea.sflag [#allocation22], %s805
        %s807 = sand.u32 %s351, 1
        %s808 = scalar_lea.vmem [#allocation21], %s807
        // Predicated region
        $region121: #{tpu_custom_call.1} parent=75 // pred_check
          %p809 = pneg %p364
        $region122: #{tpu_custom_call.1} parent=75 // pred_check_branch
          %811 = sbr.rel (%p809) target = $region124
        $region123: #{tpu_custom_call.1} parent=75 // pred_region
          %812 = dma.done %s806, 16
        $region124: #{tpu_custom_call.1} parent=75 // pred_fallthru
          _
        %s813 = sand.u32 %s50, 1
        %s814 = scalar_lea.sflag [#allocation22], %s813
        %s815 = sand.u32 %s377, 1
        %s816 = smul.addr %s815, 64
        %s817 = scalar_lea.vmem [#allocation23], %s816
        // Predicated region
        $region125: #{tpu_custom_call.1} parent=75 // pred_check
          %p818 = pneg %p390
        $region126: #{tpu_custom_call.1} parent=75 // pred_check_branch
          %820 = sbr.rel (%p818) target = $region128
        $region127: #{tpu_custom_call.1} parent=75 // pred_region
          %821 = dma.done %s814, 1024
        $region128: #{tpu_custom_call.1} parent=75 // pred_fallthru
          _
        %s822 = sand.u32 %s403, 1
        %s823 = scalar_lea.sflag [#allocation25], %s822
        %s824 = sand.u32 %s403, 1
        %s825 = scalar_lea.vmem [#allocation24], %s824
        // Predicated region
        $region129: #{tpu_custom_call.1} parent=75 // pred_check
          %p826 = pneg %p416
        $region130: #{tpu_custom_call.1} parent=75 // pred_check_branch
          %828 = sbr.rel (%p826) target = $region132
        $region131: #{tpu_custom_call.1} parent=75 // pred_region
          %829 = dma.done %s823, 16
        $region132: #{tpu_custom_call.1} parent=75 // pred_fallthru
          _
        %p830 = pneg %p78
        %p831 = pneg %p75
        %s832 = sand.u32 %s50, 1
        %s833 = scalar_lea.sflag [#allocation7], %s832
        %s834 = sand.u32 %s91, 1
        %s835 = smul.addr %s834, 8
        %s836 = scalar_lea.vmem [#allocation6], %s835
        %p837 = pneg %p104
        %p838 = pneg %p101
        %s839 = sand.u32 %s50, 1
        %s840 = scalar_lea.sflag [#allocation7], %s839
        %s841 = sand.u32 %s117, 1
        %s842 = scalar_lea.vmem [#allocation8], %s841
        %p843 = pneg %p130
        %p844 = pneg %p127
        %s845 = sand.u32 %s50, 1
        %s846 = scalar_lea.sflag [#allocation10], %s845
        %s847 = sand.u32 %s143, 1
        %s848 = scalar_lea.vmem [#allocation9], %s847
        %p849 = pneg %p156
        %p850 = pneg %p153
        %s851 = sand.u32 %s50, 1
        %s852 = scalar_lea.sflag [#allocation10], %s851
        %s853 = sand.u32 %s169, 1
        %s854 = smul.addr %s853, 16
        %s855 = scalar_lea.vmem [#allocation11], %s854
        %p856 = pneg %p182
        %p857 = pneg %p179
        %s858 = sand.u32 %s50, 1
        %s859 = scalar_lea.sflag [#allocation13], %s858
        %s860 = sand.u32 %s195, 1
        %s861 = scalar_lea.vmem [#allocation12], %s860
        %p862 = pneg %p208
        %p863 = pneg %p205
        %s864 = sand.u32 %s50, 1
        %s865 = scalar_lea.sflag [#allocation13], %s864
        %s866 = sand.u32 %s221, 1
        %s867 = smul.addr %s866, 16
        %s868 = scalar_lea.vmem [#allocation14], %s867
        %p869 = pneg %p234
        %p870 = pneg %p231
        %s871 = sand.u32 %s50, 1
        %s872 = scalar_lea.sflag [#allocation16], %s871
        %s873 = sand.u32 %s247, 1
        %s874 = scalar_lea.vmem [#allocation15], %s873
        %p875 = pneg %p260
        %p876 = pneg %p257
        %s877 = sand.u32 %s50, 1
        %s878 = scalar_lea.sflag [#allocation16], %s877
        %s879 = sand.u32 %s273, 1
        %s880 = scalar_lea.vmem [#allocation17], %s879
        %p881 = pneg %p286
        %p882 = pneg %p283
        %s883 = sand.u32 %s50, 1
        %s884 = scalar_lea.sflag [#allocation19], %s883
        %s885 = sand.u32 %s299, 1
        %s886 = scalar_lea.vmem [#allocation18], %s885
        %p887 = pneg %p312
        %p888 = pneg %p309
        %s889 = sand.u32 %s50, 1
        %s890 = scalar_lea.sflag [#allocation19], %s889
        %s891 = sand.u32 %s325, 1
        %s892 = smul.addr %s891, 16
        %s893 = scalar_lea.vmem [#allocation20], %s892
        %p894 = pneg %p338
        %p895 = pneg %p335
        %s896 = sand.u32 %s50, 1
        %s897 = scalar_lea.sflag [#allocation22], %s896
        %s898 = sand.u32 %s351, 1
        %s899 = scalar_lea.vmem [#allocation21], %s898
        %p900 = pneg %p364
        %p901 = pneg %p361
        %s902 = sand.u32 %s50, 1
        %s903 = scalar_lea.sflag [#allocation22], %s902
        %s904 = sand.u32 %s377, 1
        %s905 = smul.addr %s904, 64
        %s906 = scalar_lea.vmem [#allocation23], %s905
        %p907 = pneg %p390
        %p908 = pneg %p387
        %s909 = sand.u32 %s403, 1
        %s910 = scalar_lea.sflag [#allocation25], %s909
        %s911 = sand.u32 %s403, 1
        %s912 = scalar_lea.vmem [#allocation24], %s911
        %p913 = pneg %p416
        %p914 = pneg %p413
        %p915 = pneg %p442
        %p916 = pneg %p439
        %s917 = sand.u32 %s429, 1
        %s918 = scalar_lea.sflag [#allocation5], %s917
        %s919 = sand.u32 %s429, 1
        %s920 = smul.addr %s919, 8
        %s921 = scalar_lea.vmem [#allocation26], %s920
        %p923 = scmp.eq.s32.totalorder %s55, 0
        // Predicated region
        $region133: #{tpu_custom_call.1} parent=75 // pred_check
          %p924 = pneg %p923
        $region134: #{tpu_custom_call.1} parent=75 // pred_check_branch
          %926 = sbr.rel (%p924) target = $region136
        $region135: #{tpu_custom_call.1} parent=75 // pred_region
          %v927 = vld [vmem:[%s725] sm:$0xff]
          %vm928 = vcmask 261120
          %929 = vst.msk [vmem:[#allocation2] sm:$0xff] %vm928, %v927
        $region136: #{tpu_custom_call.1} parent=75 // pred_fallthru
          _
        %v930 = vld [vmem:[#allocation2] sm:$0xff]
        %v931 = vld [vmem:[#allocation3] sm:$0xff]
        %v932 = vld [vmem:[%s733] sm:$0x1]
        %v933 = vld [vmem:[%s741] sm:$0x1]
        %vm934 = vcmask 261120
        %v935 = vsel %vm934, %v930, 0.0
        %936 = vadd.xlane.f32.xlu0 %v935
        %v937 = vpop.xlane.xlu0 %936
        %v938 = vrcp.pop 32.0
        %v939 = vmul.f32 %v937, %v938
        %v940 = vsub.f32 %v930, %v939
        %v941 = vmul.f32 %v940, %v940
        %v942 = vsel %vm934, %v941, 0.0
        %943 = vadd.xlane.f32.xlu0 %v942
        %v944 = vpop.xlane.xlu0 %943
        %v945 = vmul.f32 %v944, %v938
        %v946 = vadd.f32 %v945, 1e-12
        %v947 = vrsqrt.pop %v946
        %v948 = vmul.f32 %v946, %v947
        %vm949 = vcmp.eq.f32.partialorder %v946, inf
        %v950 = vsel %vm949, %v946, %v948
        %vm951 = vcmp.eq.f32.partialorder %v946, 0.0
        %v952 = vand.u32 %v946, 2147483648
        %v953 = vsel %vm951, %v952, %v950
        %v954 = vrcp.pop %v953
        %v955 = vmul.f32 %v940, %v954
        %v957 = vlaneseq
        %v958 = vshrl.u32 %v957, 7
        %v959 = vsub.s32 0, %v958
        %v960 = vrot.slane %v932, %v959
        %v962 = vmul.f32 %v960, %v955
        %v964 = vlaneseq
        %v965 = vshrl.u32 %v964, 7
        %v966 = vsub.s32 0, %v965
        %v967 = vrot.slane %v933, %v966
        %v969 = vadd.f32 %v962, %v967
        %v970 = vpack.c.bf16 %v969, %v969
        %v971 = vld [vmem:[%s750] sm:$0xf]
        %v972 = vld [vmem:[%s750 + $0x4] sm:$0xf]
        %v973 = vld [vmem:[%s750 + $0x8] sm:$0xf]
        %v974 = vld [vmem:[%s750 + $0xc] sm:$0xf]
        %v975 = vld [vmem:[%s758] sm:$0x1]
        %v977 = vlaneseq
        %v978 = vshrl.u32 %v977, 7
        %v979 = vsub.s32 0, %v978
        %v980 = vrot.slane %v975, %v979
        %v986 = vunpack.c.l.b16 %v971
        %v987 = vunpack.c.l.b16 %v972
        %v988 = vunpack.c.l.b16 %v973
        %v989 = vunpack.c.l.b16 %v974
        %v990 = vpack.c.b16 %v987, %v986
        %v991 = vpack.c.b16 %v989, %v988
        %v995 = vsel %vm934, %v970, 0
        %997 = vmatprep.subr.bf16.mxu0 0
        %998 = vmatpush1.bf16.msra.mxu0 %v990
        %999 = vmatprep.subr.bf16.mxu0 0
        %1000 = vmatpush1.bf16.msra.mxu0 %v991
        %1001 = vmatprep.subr.bf16.mxu0 0
        %1002 = vmatpush1.bf16.msra.mxu0 0
        %1003 = vmatprep.subr.bf16.mxu0 0
        %1004 = vmatpush1.bf16.msra.mxu0 0
        %1005 = vmatprep.subr.bf16.mxu0 0
        %1006 = vmatpush1.bf16.msra.mxu0 0
        %1007 = vmatprep.subr.bf16.mxu0 0
        %1008 = vmatpush1.bf16.msra.mxu0 0
        %1009 = vmatprep.subr.bf16.mxu0 0
        %1010 = vmatpush1.bf16.msra.mxu0 0
        %1011 = vmatprep.subr.bf16.mxu0 0
        %1012 = vmatpush1.bf16.msra.mxu0 0
        %1013 = vmatprep.subr.bf16.mxu0 0
        %1014 = vmatpush1.bf16.msra.mxu0 0
        %1015 = vmatprep.subr.bf16.mxu0 0
        %1016 = vmatpush1.bf16.msra.mxu0 0
        %1017 = vmatprep.subr.bf16.mxu0 0
        %1018 = vmatpush1.bf16.msra.mxu0 0
        %1019 = vmatprep.subr.bf16.mxu0 0
        %1020 = vmatpush1.bf16.msra.mxu0 0
        %1021 = vmatprep.subr.bf16.mxu0 0
        %1022 = vmatpush1.bf16.msra.mxu0 0
        %1023 = vmatprep.subr.bf16.mxu0 0
        %1024 = vmatpush1.bf16.msra.mxu0 0
        %1025 = vmatprep.subr.bf16.mxu0 0
        %1026 = vmatpush1.bf16.msra.mxu0 0
        %1027 = vmatprep.subr.bf16.mxu0 0
        %1028 = vmatpush1.bf16.msra.mxu0 0
        %1029 = vmatprep.mubr.bf16.mxu0 0
        %1030 = vmatmul.mubr.bf16.gmra.mrb[0].mxu0 %v995
        %v1031 = vpop.f32.mrb[0].mxu0
        %v1032 = vadd.f32 %v980, %v1031
        %v1033 = vpop.f32.mrb[0].mxu0
        %v1034 = vpop.f32.mrb[0].mxu0
        %v1035 = vpop.f32.mrb[0].mxu0
        %1036 = vdwg.mxu0
        %v1037 = vmul.f32 %v1032, 0.35355338
        %v1038 = vpack.c.bf16 %v1037, %v1037
        %v1039 = vpack.c.bf16 %v1032, %v1032
        %1041 = vrot.lane.b32.xlu0 %v1039, 96
        %v1042 = vpop.permute.xlu0 %1041
        %vm1043 = vcmask 64512
        %v1045 = vsel %vm1043, %v1038, 0
        %v1048 = vsel %vm1043, %v1042, 0
        %1050 = vmatprep.subr.bf16.mxu0 0
        %1051 = vmatpush1.bf16.xpose.msra.mxu0 %v1048
        %1052 = vmatprep.subr.bf16.mxu0 0
        %1053 = vmatpush1.bf16.xpose.msra.mxu0 0
        %1054 = vmatprep.subr.bf16.mxu0 0
        %1055 = vmatpush1.bf16.xpose.msra.mxu0 0
        %1056 = vmatprep.subr.bf16.mxu0 0
        %1057 = vmatpush1.bf16.xpose.msra.mxu0 0
        %1058 = vmatprep.subr.bf16.mxu0 0
        %1059 = vmatpush1.bf16.xpose.msra.mxu0 0
        %1060 = vmatprep.subr.bf16.mxu0 0
        %1061 = vmatpush1.bf16.xpose.msra.mxu0 0
        %1062 = vmatprep.subr.bf16.mxu0 0
        %1063 = vmatpush1.bf16.xpose.msra.mxu0 0
        %1064 = vmatprep.subr.bf16.mxu0 0
        %1065 = vmatpush1.bf16.xpose.msra.mxu0 0
        %1066 = vmatprep.subr.bf16.mxu0 0
        %1067 = vmatpush1.bf16.xpose.msra.mxu0 0
        %1068 = vmatprep.subr.bf16.mxu0 0
        %1069 = vmatpush1.bf16.xpose.msra.mxu0 0
        %1070 = vmatprep.subr.bf16.mxu0 0
        %1071 = vmatpush1.bf16.xpose.msra.mxu0 0
        %1072 = vmatprep.subr.bf16.mxu0 0
        %1073 = vmatpush1.bf16.xpose.msra.mxu0 0
        %1074 = vmatprep.subr.bf16.mxu0 0
        %1075 = vmatpush1.bf16.xpose.msra.mxu0 0
        %1076 = vmatprep.subr.bf16.mxu0 0
        %1077 = vmatpush1.bf16.xpose.msra.mxu0 0
        %1078 = vmatprep.subr.bf16.mxu0 0
        %1079 = vmatpush1.bf16.xpose.msra.mxu0 0
        %1080 = vmatprep.subr.bf16.mxu0 0
        %1081 = vmatpush1.bf16.xpose.msra.mxu0 0
        %1082 = vmatprep.mubr.bf16.mxu0 0
        %1083 = vmatmul.mubr.bf16.gmra.mrb[0].mxu0 %v1045
        %v1084 = vpop.f32.mrb[0].mxu0
        %v1085 = vadd.f32 %v931, %v1084
        %v1086 = vpop.f32.mrb[0].mxu0
        %v1087 = vpop.f32.mrb[0].mxu0
        %v1088 = vpop.f32.mrb[0].mxu0
        %1089 = vdwg.mxu0
        %v1090 = vsel %vm1043, %v1085, -inf
        %1091 = vmax.xlane.f32.xlu0 %v1090
        %v1092 = vpop.xlane.xlu0 %1091
        %v1093 = vsub.f32 %v1085, %v1092
        %v1094 = vmul.f32 %v1093, 1.442695
        %v1095 = vpow.pop %v1094
        %v1096 = vsel %vm1043, %v1095, 0.0
        %1097 = vadd.xlane.f32.xlu0 %v1096
        %v1098 = vpop.xlane.xlu0 %1097
        %v1099 = vrcp.pop %v1098
        %v1100 = vmul.f32 %v1095, %v1099
        %v1101 = vpack.c.bf16 %v1100, %v1100
        %1102 = vrot.lane.b32.xlu0 %v1039, 64
        %v1103 = vpop.permute.xlu0 %1102
        %v1105 = vsel %vm1043, %v1101, 0
        %vm1107 = vcmask 1043456
        %v1109 = vsel %vm1107, %v1103, 0
        %1111 = vmatprep.subr.bf16.mxu0 0
        %1112 = vmatpush1.bf16.msra.mxu0 %v1109
        %1113 = vmatprep.subr.bf16.mxu0 0
        %1114 = vmatpush1.bf16.msra.mxu0 0
        %1115 = vmatprep.subr.bf16.mxu0 0
        %1116 = vmatpush1.bf16.msra.mxu0 0
        %1117 = vmatprep.subr.bf16.mxu0 0
        %1118 = vmatpush1.bf16.msra.mxu0 0
        %1119 = vmatprep.subr.bf16.mxu0 0
        %1120 = vmatpush1.bf16.msra.mxu0 0
        %1121 = vmatprep.subr.bf16.mxu0 0
        %1122 = vmatpush1.bf16.msra.mxu0 0
        %1123 = vmatprep.subr.bf16.mxu0 0
        %1124 = vmatpush1.bf16.msra.mxu0 0
        %1125 = vmatprep.subr.bf16.mxu0 0
        %1126 = vmatpush1.bf16.msra.mxu0 0
        %1127 = vmatprep.subr.bf16.mxu0 0
        %1128 = vmatpush1.bf16.msra.mxu0 0
        %1129 = vmatprep.subr.bf16.mxu0 0
        %1130 = vmatpush1.bf16.msra.mxu0 0
        %1131 = vmatprep.subr.bf16.mxu0 0
        %1132 = vmatpush1.bf16.msra.mxu0 0
        %1133 = vmatprep.subr.bf16.mxu0 0
        %1134 = vmatpush1.bf16.msra.mxu0 0
        %1135 = vmatprep.subr.bf16.mxu0 0
        %1136 = vmatpush1.bf16.msra.mxu0 0
        %1137 = vmatprep.subr.bf16.mxu0 0
        %1138 = vmatpush1.bf16.msra.mxu0 0
        %1139 = vmatprep.subr.bf16.mxu0 0
        %1140 = vmatpush1.bf16.msra.mxu0 0
        %1141 = vmatprep.subr.bf16.mxu0 0
        %1142 = vmatpush1.bf16.msra.mxu0 0
        %1143 = vmatprep.mubr.bf16.mxu0 0
        %1144 = vmatmul.mubr.bf16.gmra.mrb[0].mxu0 %v1105
        %v1145 = vpop.f32.mrb[0].mxu0
        %v1146 = vadd.f32 0.0, %v1145
        %v1147 = vpop.f32.mrb[0].mxu0
        %v1148 = vpop.f32.mrb[0].mxu0
        %v1149 = vpop.f32.mrb[0].mxu0
        %1150 = vdwg.mxu0
        %1152 = vrot.lane.b32.xlu0 %v1038, 120
        %v1153 = vpop.permute.xlu0 %1152
        %1154 = vrot.lane.b32.xlu0 %v1039, 88
        %v1155 = vpop.permute.xlu0 %1154
        %v1157 = vsel %vm1043, %v1153, 0
        %v1160 = vsel %vm1043, %v1155, 0
        %1162 = vmatprep.subr.bf16.mxu0 0
        %1163 = vmatpush1.bf16.xpose.msra.mxu0 %v1160
        %1164 = vmatprep.subr.bf16.mxu0 0
        %1165 = vmatpush1.bf16.xpose.msra.mxu0 0
        %1166 = vmatprep.subr.bf16.mxu0 0
        %1167 = vmatpush1.bf16.xpose.msra.mxu0 0
        %1168 = vmatprep.subr.bf16.mxu0 0
        %1169 = vmatpush1.bf16.xpose.msra.mxu0 0
        %1170 = vmatprep.subr.bf16.mxu0 0
        %1171 = vmatpush1.bf16.xpose.msra.mxu0 0
        %1172 = vmatprep.subr.bf16.mxu0 0
        %1173 = vmatpush1.bf16.xpose.msra.mxu0 0
        %1174 = vmatprep.subr.bf16.mxu0 0
        %1175 = vmatpush1.bf16.xpose.msra.mxu0 0
        %1176 = vmatprep.subr.bf16.mxu0 0
        %1177 = vmatpush1.bf16.xpose.msra.mxu0 0
        %1178 = vmatprep.subr.bf16.mxu0 0
        %1179 = vmatpush1.bf16.xpose.msra.mxu0 0
        %1180 = vmatprep.subr.bf16.mxu0 0
        %1181 = vmatpush1.bf16.xpose.msra.mxu0 0
        %1182 = vmatprep.subr.bf16.mxu0 0
        %1183 = vmatpush1.bf16.xpose.msra.mxu0 0
        %1184 = vmatprep.subr.bf16.mxu0 0
        %1185 = vmatpush1.bf16.xpose.msra.mxu0 0
        %1186 = vmatprep.subr.bf16.mxu0 0
        %1187 = vmatpush1.bf16.xpose.msra.mxu0 0
        %1188 = vmatprep.subr.bf16.mxu0 0
        %1189 = vmatpush1.bf16.xpose.msra.mxu0 0
        %1190 = vmatprep.subr.bf16.mxu0 0
        %1191 = vmatpush1.bf16.xpose.msra.mxu0 0
        %1192 = vmatprep.subr.bf16.mxu0 0
        %1193 = vmatpush1.bf16.xpose.msra.mxu0 0
        %1194 = vmatprep.mubr.bf16.mxu0 0
        %1195 = vmatmul.mubr.bf16.gmra.mrb[0].mxu0 %v1157
        %v1196 = vpop.f32.mrb[0].mxu0
        %v1197 = vadd.f32 %v931, %v1196
        %v1198 = vpop.f32.mrb[0].mxu0
        %v1199 = vpop.f32.mrb[0].mxu0
        %v1200 = vpop.f32.mrb[0].mxu0
        %1201 = vdwg.mxu0
        %v1202 = vsel %vm1043, %v1197, -inf
        %1203 = vmax.xlane.f32.xlu0 %v1202
        %v1204 = vpop.xlane.xlu0 %1203
        %v1205 = vsub.f32 %v1197, %v1204
        %v1206 = vmul.f32 %v1205, 1.442695
        %v1207 = vpow.pop %v1206
        %v1208 = vsel %vm1043, %v1207, 0.0
        %1209 = vadd.xlane.f32.xlu0 %v1208
        %v1210 = vpop.xlane.xlu0 %1209
        %v1211 = vrcp.pop %v1210
        %v1212 = vmul.f32 %v1207, %v1211
        %v1213 = vpack.c.bf16 %v1212, %v1212
        %1214 = vrot.lane.b32.xlu0 %v1039, 56
        %v1215 = vpop.permute.xlu0 %1214
        %v1217 = vsel %vm1043, %v1213, 0
        %v1220 = vsel %vm1107, %v1215, 0
        %1222 = vmatprep.subr.bf16.mxu0 0
        %1223 = vmatpush1.bf16.msra.mxu0 %v1220
        %1224 = vmatprep.subr.bf16.mxu0 0
        %1225 = vmatpush1.bf16.msra.mxu0 0
        %1226 = vmatprep.subr.bf16.mxu0 0
        %1227 = vmatpush1.bf16.msra.mxu0 0
        %1228 = vmatprep.subr.bf16.mxu0 0
        %1229 = vmatpush1.bf16.msra.mxu0 0
        %1230 = vmatprep.subr.bf16.mxu0 0
        %1231 = vmatpush1.bf16.msra.mxu0 0
        %1232 = vmatprep.subr.bf16.mxu0 0
        %1233 = vmatpush1.bf16.msra.mxu0 0
        %1234 = vmatprep.subr.bf16.mxu0 0
        %1235 = vmatpush1.bf16.msra.mxu0 0
        %1236 = vmatprep.subr.bf16.mxu0 0
        %1237 = vmatpush1.bf16.msra.mxu0 0
        %1238 = vmatprep.subr.bf16.mxu0 0
        %1239 = vmatpush1.bf16.msra.mxu0 0
        %1240 = vmatprep.subr.bf16.mxu0 0
        %1241 = vmatpush1.bf16.msra.mxu0 0
        %1242 = vmatprep.subr.bf16.mxu0 0
        %1243 = vmatpush1.bf16.msra.mxu0 0
        %1244 = vmatprep.subr.bf16.mxu0 0
        %1245 = vmatpush1.bf16.msra.mxu0 0
        %1246 = vmatprep.subr.bf16.mxu0 0
        %1247 = vmatpush1.bf16.msra.mxu0 0
        %1248 = vmatprep.subr.bf16.mxu0 0
        %1249 = vmatpush1.bf16.msra.mxu0 0
        %1250 = vmatprep.subr.bf16.mxu0 0
        %1251 = vmatpush1.bf16.msra.mxu0 0
        %1252 = vmatprep.subr.bf16.mxu0 0
        %1253 = vmatpush1.bf16.msra.mxu0 0
        %1254 = vmatprep.mubr.bf16.mxu0 0
        %1255 = vmatmul.mubr.bf16.gmra.mrb[0].mxu0 %v1217
        %v1256 = vpop.f32.mrb[0].mxu0
        %v1257 = vadd.f32 0.0, %v1256
        %v1258 = vpop.f32.mrb[0].mxu0
        %v1259 = vpop.f32.mrb[0].mxu0
        %v1260 = vpop.f32.mrb[0].mxu0
        %1261 = vdwg.mxu0
        %1262 = vrot.lane.b32.xlu0 %v1038, 112
        %v1263 = vpop.permute.xlu0 %1262
        %1264 = vrot.lane.b32.xlu0 %v1039, 80
        %v1265 = vpop.permute.xlu0 %1264
        %v1267 = vsel %vm1043, %v1263, 0
        %v1270 = vsel %vm1043, %v1265, 0
        %1272 = vmatprep.subr.bf16.mxu0 0
        %1273 = vmatpush1.bf16.xpose.msra.mxu0 %v1270
        %1274 = vmatprep.subr.bf16.mxu0 0
        %1275 = vmatpush1.bf16.xpose.msra.mxu0 0
        %1276 = vmatprep.subr.bf16.mxu0 0
        %1277 = vmatpush1.bf16.xpose.msra.mxu0 0
        %1278 = vmatprep.subr.bf16.mxu0 0
        %1279 = vmatpush1.bf16.xpose.msra.mxu0 0
        %1280 = vmatprep.subr.bf16.mxu0 0
        %1281 = vmatpush1.bf16.xpose.msra.mxu0 0
        %1282 = vmatprep.subr.bf16.mxu0 0
        %1283 = vmatpush1.bf16.xpose.msra.mxu0 0
        %1284 = vmatprep.subr.bf16.mxu0 0
        %1285 = vmatpush1.bf16.xpose.msra.mxu0 0
        %1286 = vmatprep.subr.bf16.mxu0 0
        %1287 = vmatpush1.bf16.xpose.msra.mxu0 0
        %1288 = vmatprep.subr.bf16.mxu0 0
        %1289 = vmatpush1.bf16.xpose.msra.mxu0 0
        %1290 = vmatprep.subr.bf16.mxu0 0
        %1291 = vmatpush1.bf16.xpose.msra.mxu0 0
        %1292 = vmatprep.subr.bf16.mxu0 0
        %1293 = vmatpush1.bf16.xpose.msra.mxu0 0
        %1294 = vmatprep.subr.bf16.mxu0 0
        %1295 = vmatpush1.bf16.xpose.msra.mxu0 0
        %1296 = vmatprep.subr.bf16.mxu0 0
        %1297 = vmatpush1.bf16.xpose.msra.mxu0 0
        %1298 = vmatprep.subr.bf16.mxu0 0
        %1299 = vmatpush1.bf16.xpose.msra.mxu0 0
        %1300 = vmatprep.subr.bf16.mxu0 0
        %1301 = vmatpush1.bf16.xpose.msra.mxu0 0
        %1302 = vmatprep.subr.bf16.mxu0 0
        %1303 = vmatpush1.bf16.xpose.msra.mxu0 0
        %1304 = vmatprep.mubr.bf16.mxu0 0
        %1305 = vmatmul.mubr.bf16.gmra.mrb[0].mxu0 %v1267
        %v1306 = vpop.f32.mrb[0].mxu0
        %v1307 = vadd.f32 %v931, %v1306
        %v1308 = vpop.f32.mrb[0].mxu0
        %v1309 = vpop.f32.mrb[0].mxu0
        %v1310 = vpop.f32.mrb[0].mxu0
        %1311 = vdwg.mxu0
        %v1312 = vsel %vm1043, %v1307, -inf
        %1313 = vmax.xlane.f32.xlu0 %v1312
        %v1314 = vpop.xlane.xlu0 %1313
        %v1315 = vsub.f32 %v1307, %v1314
        %v1316 = vmul.f32 %v1315, 1.442695
        %v1317 = vpow.pop %v1316
        %v1318 = vsel %vm1043, %v1317, 0.0
        %1319 = vadd.xlane.f32.xlu0 %v1318
        %v1320 = vpop.xlane.xlu0 %1319
        %v1321 = vrcp.pop %v1320
        %v1322 = vmul.f32 %v1317, %v1321
        %v1323 = vpack.c.bf16 %v1322, %v1322
        %1324 = vrot.lane.b32.xlu0 %v1039, 48
        %v1325 = vpop.permute.xlu0 %1324
        %v1327 = vsel %vm1043, %v1323, 0
        %v1330 = vsel %vm1107, %v1325, 0
        %1332 = vmatprep.subr.bf16.mxu0 0
        %1333 = vmatpush1.bf16.msra.mxu0 %v1330
        %1334 = vmatprep.subr.bf16.mxu0 0
        %1335 = vmatpush1.bf16.msra.mxu0 0
        %1336 = vmatprep.subr.bf16.mxu0 0
        %1337 = vmatpush1.bf16.msra.mxu0 0
        %1338 = vmatprep.subr.bf16.mxu0 0
        %1339 = vmatpush1.bf16.msra.mxu0 0
        %1340 = vmatprep.subr.bf16.mxu0 0
        %1341 = vmatpush1.bf16.msra.mxu0 0
        %1342 = vmatprep.subr.bf16.mxu0 0
        %1343 = vmatpush1.bf16.msra.mxu0 0
        %1344 = vmatprep.subr.bf16.mxu0 0
        %1345 = vmatpush1.bf16.msra.mxu0 0
        %1346 = vmatprep.subr.bf16.mxu0 0
        %1347 = vmatpush1.bf16.msra.mxu0 0
        %1348 = vmatprep.subr.bf16.mxu0 0
        %1349 = vmatpush1.bf16.msra.mxu0 0
        %1350 = vmatprep.subr.bf16.mxu0 0
        %1351 = vmatpush1.bf16.msra.mxu0 0
        %1352 = vmatprep.subr.bf16.mxu0 0
        %1353 = vmatpush1.bf16.msra.mxu0 0
        %1354 = vmatprep.subr.bf16.mxu0 0
        %1355 = vmatpush1.bf16.msra.mxu0 0
        %1356 = vmatprep.subr.bf16.mxu0 0
        %1357 = vmatpush1.bf16.msra.mxu0 0
        %1358 = vmatprep.subr.bf16.mxu0 0
        %1359 = vmatpush1.bf16.msra.mxu0 0
        %1360 = vmatprep.subr.bf16.mxu0 0
        %1361 = vmatpush1.bf16.msra.mxu0 0
        %1362 = vmatprep.subr.bf16.mxu0 0
        %1363 = vmatpush1.bf16.msra.mxu0 0
        %1364 = vmatprep.mubr.bf16.mxu0 0
        %1365 = vmatmul.mubr.bf16.gmra.mrb[0].mxu0 %v1327
        %v1366 = vpop.f32.mrb[0].mxu0
        %v1367 = vadd.f32 0.0, %v1366
        %v1368 = vpop.f32.mrb[0].mxu0
        %v1369 = vpop.f32.mrb[0].mxu0
        %v1370 = vpop.f32.mrb[0].mxu0
        %1371 = vdwg.mxu0
        %1372 = vrot.lane.b32.xlu0 %v1038, 104
        %v1373 = vpop.permute.xlu0 %1372
        %1374 = vrot.lane.b32.xlu0 %v1039, 72
        %v1375 = vpop.permute.xlu0 %1374
        %v1377 = vsel %vm1043, %v1373, 0
        %v1380 = vsel %vm1043, %v1375, 0
        %1382 = vmatprep.subr.bf16.mxu0 0
        %1383 = vmatpush1.bf16.xpose.msra.mxu0 %v1380
        %1384 = vmatprep.subr.bf16.mxu0 0
        %1385 = vmatpush1.bf16.xpose.msra.mxu0 0
        %1386 = vmatprep.subr.bf16.mxu0 0
        %1387 = vmatpush1.bf16.xpose.msra.mxu0 0
        %1388 = vmatprep.subr.bf16.mxu0 0
        %1389 = vmatpush1.bf16.xpose.msra.mxu0 0
        %1390 = vmatprep.subr.bf16.mxu0 0
        %1391 = vmatpush1.bf16.xpose.msra.mxu0 0
        %1392 = vmatprep.subr.bf16.mxu0 0
        %1393 = vmatpush1.bf16.xpose.msra.mxu0 0
        %1394 = vmatprep.subr.bf16.mxu0 0
        %1395 = vmatpush1.bf16.xpose.msra.mxu0 0
        %1396 = vmatprep.subr.bf16.mxu0 0
        %1397 = vmatpush1.bf16.xpose.msra.mxu0 0
        %1398 = vmatprep.subr.bf16.mxu0 0
        %1399 = vmatpush1.bf16.xpose.msra.mxu0 0
        %1400 = vmatprep.subr.bf16.mxu0 0
        %1401 = vmatpush1.bf16.xpose.msra.mxu0 0
        %1402 = vmatprep.subr.bf16.mxu0 0
        %1403 = vmatpush1.bf16.xpose.msra.mxu0 0
        %1404 = vmatprep.subr.bf16.mxu0 0
        %1405 = vmatpush1.bf16.xpose.msra.mxu0 0
        %1406 = vmatprep.subr.bf16.mxu0 0
        %1407 = vmatpush1.bf16.xpose.msra.mxu0 0
        %1408 = vmatprep.subr.bf16.mxu0 0
        %1409 = vmatpush1.bf16.xpose.msra.mxu0 0
        %1410 = vmatprep.subr.bf16.mxu0 0
        %1411 = vmatpush1.bf16.xpose.msra.mxu0 0
        %1412 = vmatprep.subr.bf16.mxu0 0
        %1413 = vmatpush1.bf16.xpose.msra.mxu0 0
        %1414 = vmatprep.mubr.bf16.mxu0 0
        %1415 = vmatmul.mubr.bf16.gmra.mrb[0].mxu0 %v1377
        %v1416 = vpop.f32.mrb[0].mxu0
        %v1417 = vadd.f32 %v931, %v1416
        %v1418 = vpop.f32.mrb[0].mxu0
        %v1419 = vpop.f32.mrb[0].mxu0
        %v1420 = vpop.f32.mrb[0].mxu0
        %1421 = vdwg.mxu0
        %v1422 = vsel %vm1043, %v1417, -inf
        %1423 = vmax.xlane.f32.xlu0 %v1422
        %v1424 = vpop.xlane.xlu0 %1423
        %v1425 = vsub.f32 %v1417, %v1424
        %v1426 = vmul.f32 %v1425, 1.442695
        %v1427 = vpow.pop %v1426
        %v1428 = vsel %vm1043, %v1427, 0.0
        %1429 = vadd.xlane.f32.xlu0 %v1428
        %v1430 = vpop.xlane.xlu0 %1429
        %v1431 = vrcp.pop %v1430
        %v1432 = vmul.f32 %v1427, %v1431
        %v1433 = vpack.c.bf16 %v1432, %v1432
        %1434 = vrot.lane.b32.xlu0 %v1039, 40
        %v1435 = vpop.permute.xlu0 %1434
        %v1437 = vsel %vm1043, %v1433, 0
        %v1440 = vsel %vm1107, %v1435, 0
        %1442 = vmatprep.subr.bf16.mxu0 0
        %1443 = vmatpush1.bf16.msra.mxu0 %v1440
        %1444 = vmatprep.subr.bf16.mxu0 0
        %1445 = vmatpush1.bf16.msra.mxu0 0
        %1446 = vmatprep.subr.bf16.mxu0 0
        %1447 = vmatpush1.bf16.msra.mxu0 0
        %1448 = vmatprep.subr.bf16.mxu0 0
        %1449 = vmatpush1.bf16.msra.mxu0 0
        %1450 = vmatprep.subr.bf16.mxu0 0
        %1451 = vmatpush1.bf16.msra.mxu0 0
        %1452 = vmatprep.subr.bf16.mxu0 0
        %1453 = vmatpush1.bf16.msra.mxu0 0
        %1454 = vmatprep.subr.bf16.mxu0 0
        %1455 = vmatpush1.bf16.msra.mxu0 0
        %1456 = vmatprep.subr.bf16.mxu0 0
        %1457 = vmatpush1.bf16.msra.mxu0 0
        %1458 = vmatprep.subr.bf16.mxu0 0
        %1459 = vmatpush1.bf16.msra.mxu0 0
        %1460 = vmatprep.subr.bf16.mxu0 0
        %1461 = vmatpush1.bf16.msra.mxu0 0
        %1462 = vmatprep.subr.bf16.mxu0 0
        %1463 = vmatpush1.bf16.msra.mxu0 0
        %1464 = vmatprep.subr.bf16.mxu0 0
        %1465 = vmatpush1.bf16.msra.mxu0 0
        %1466 = vmatprep.subr.bf16.mxu0 0
        %1467 = vmatpush1.bf16.msra.mxu0 0
        %1468 = vmatprep.subr.bf16.mxu0 0
        %1469 = vmatpush1.bf16.msra.mxu0 0
        %1470 = vmatprep.subr.bf16.mxu0 0
        %1471 = vmatpush1.bf16.msra.mxu0 0
        %1472 = vmatprep.subr.bf16.mxu0 0
        %1473 = vmatpush1.bf16.msra.mxu0 0
        %1474 = vmatprep.mubr.bf16.mxu0 0
        %1475 = vmatmul.mubr.bf16.gmra.mrb[0].mxu0 %v1437
        %v1476 = vpop.f32.mrb[0].mxu0
        %v1477 = vadd.f32 0.0, %v1476
        %v1478 = vpop.f32.mrb[0].mxu0
        %v1479 = vpop.f32.mrb[0].mxu0
        %v1480 = vpop.f32.mrb[0].mxu0
        %1481 = vdwg.mxu0
        %1483 = vrot.lane.b32.xlu0 %v1257, 8
        %v1484 = vpop.permute.xlu0 %1483
        %1487 = vrot.lane.b32.xlu0 %v1367, 16
        %v1488 = vpop.permute.xlu0 %1487
        %1491 = vrot.lane.b32.xlu0 %v1477, 24
        %v1492 = vpop.permute.xlu0 %1491
        %v1494 = vsel %vm1043, %v1146, %v1484
        %vm1495 = vcmask 130048
        %v1496 = vsel %vm1495, %v1494, %v1488
        %vm1497 = vcmask 195584
        %v1498 = vsel %vm1497, %v1496, %v1492
        %v1499 = vpack.c.bf16 %v1498, %v1498
        %v1500 = vld [vmem:[%s767] sm:$0xf]
        %v1501 = vld [vmem:[%s767 + $0x4] sm:$0xf]
        %v1502 = vld [vmem:[%s767 + $0x8] sm:$0xf]
        %v1503 = vld [vmem:[%s767 + $0xc] sm:$0xf]
        %v1508 = vunpack.c.l.b16 %v1500
        %v1509 = vunpack.c.l.b16 %v1501
        %v1510 = vunpack.c.l.b16 %v1502
        %v1511 = vunpack.c.l.b16 %v1503
        %v1512 = vpack.c.b16 %v1509, %v1508
        %v1513 = vpack.c.b16 %v1511, %v1510
        %v1517 = vsel %vm934, %v1499, 0
        %1519 = vmatprep.subr.bf16.mxu0 0
        %1520 = vmatpush1.bf16.msra.mxu0 %v1512
        %1521 = vmatprep.subr.bf16.mxu0 0
        %1522 = vmatpush1.bf16.msra.mxu0 %v1513
        %1523 = vmatprep.subr.bf16.mxu0 0
        %1524 = vmatpush1.bf16.msra.mxu0 0
        %1525 = vmatprep.subr.bf16.mxu0 0
        %1526 = vmatpush1.bf16.msra.mxu0 0
        %1527 = vmatprep.subr.bf16.mxu0 0
        %1528 = vmatpush1.bf16.msra.mxu0 0
        %1529 = vmatprep.subr.bf16.mxu0 0
        %1530 = vmatpush1.bf16.msra.mxu0 0
        %1531 = vmatprep.subr.bf16.mxu0 0
        %1532 = vmatpush1.bf16.msra.mxu0 0
        %1533 = vmatprep.subr.bf16.mxu0 0
        %1534 = vmatpush1.bf16.msra.mxu0 0
        %1535 = vmatprep.subr.bf16.mxu0 0
        %1536 = vmatpush1.bf16.msra.mxu0 0
        %1537 = vmatprep.subr.bf16.mxu0 0
        %1538 = vmatpush1.bf16.msra.mxu0 0
        %1539 = vmatprep.subr.bf16.mxu0 0
        %1540 = vmatpush1.bf16.msra.mxu0 0
        %1541 = vmatprep.subr.bf16.mxu0 0
        %1542 = vmatpush1.bf16.msra.mxu0 0
        %1543 = vmatprep.subr.bf16.mxu0 0
        %1544 = vmatpush1.bf16.msra.mxu0 0
        %1545 = vmatprep.subr.bf16.mxu0 0
        %1546 = vmatpush1.bf16.msra.mxu0 0
        %1547 = vmatprep.subr.bf16.mxu0 0
        %1548 = vmatpush1.bf16.msra.mxu0 0
        %1549 = vmatprep.subr.bf16.mxu0 0
        %1550 = vmatpush1.bf16.msra.mxu0 0
        %1551 = vmatprep.mubr.bf16.mxu0 0
        %1552 = vmatmul.mubr.bf16.gmra.mrb[0].mxu0 %v1517
        %v1553 = vpop.f32.mrb[0].mxu0
        %v1554 = vadd.f32 0.0, %v1553
        %v1555 = vpop.f32.mrb[0].mxu0
        %v1556 = vpop.f32.mrb[0].mxu0
        %v1557 = vpop.f32.mrb[0].mxu0
        %1558 = vdwg.mxu0
        %v1559 = vadd.f32 %v930, %v1554
        %v1560 = vld [vmem:[%s775] sm:$0x1]
        %v1562 = vlaneseq
        %v1563 = vshrl.u32 %v1562, 7
        %v1564 = vsub.s32 0, %v1563
        %v1565 = vrot.slane %v1560, %v1564
        %v1567 = vadd.f32 %v1559, %v1565
        %v1568 = vld [vmem:[%s783] sm:$0x1]
        %v1569 = vld [vmem:[%s791] sm:$0x1]
        %v1570 = vsel %vm934, %v1567, 0.0
        %1571 = vadd.xlane.f32.xlu0 %v1570
        %v1572 = vpop.xlane.xlu0 %1571
        %v1573 = vmul.f32 %v1572, %v938
        %v1574 = vsub.f32 %v1567, %v1573
        %v1575 = vmul.f32 %v1574, %v1574
        %v1576 = vsel %vm934, %v1575, 0.0
        %1577 = vadd.xlane.f32.xlu0 %v1576
        %v1578 = vpop.xlane.xlu0 %1577
        %v1579 = vmul.f32 %v1578, %v938
        %v1580 = vadd.f32 %v1579, 1e-12
        %v1581 = vrsqrt.pop %v1580
        %v1582 = vmul.f32 %v1580, %v1581
        %vm1583 = vcmp.eq.f32.partialorder %v1580, inf
        %v1584 = vsel %vm1583, %v1580, %v1582
        %vm1585 = vcmp.eq.f32.partialorder %v1580, 0.0
        %v1586 = vand.u32 %v1580, 2147483648
        %v1587 = vsel %vm1585, %v1586, %v1584
        %v1588 = vrcp.pop %v1587
        %v1589 = vmul.f32 %v1574, %v1588
        %v1591 = vlaneseq
        %v1592 = vshrl.u32 %v1591, 7
        %v1593 = vsub.s32 0, %v1592
        %v1594 = vrot.slane %v1568, %v1593
        %v1596 = vmul.f32 %v1594, %v1589
        %v1598 = vlaneseq
        %v1599 = vshrl.u32 %v1598, 7
        %v1600 = vsub.s32 0, %v1599
        %v1601 = vrot.slane %v1569, %v1600
        %v1603 = vadd.f32 %v1596, %v1601
        %v1604 = vpack.c.bf16 %v1603, %v1603
        %v1605 = vld [vmem:[%s800] sm:$0xf]
        %v1606 = vld [vmem:[%s800 + $0x4] sm:$0xf]
        %v1607 = vld [vmem:[%s800 + $0x8] sm:$0xf]
        %v1608 = vld [vmem:[%s800 + $0xc] sm:$0xf]
        %v1609 = vld [vmem:[%s808] sm:$0x1]
        %v1611 = vlaneseq
        %v1612 = vshrl.u32 %v1611, 7
        %v1613 = vsub.s32 0, %v1612
        %v1614 = vrot.slane %v1609, %v1613
        %v1620 = vunpack.c.l.b16 %v1605
        %v1621 = vunpack.c.l.b16 %v1606
        %v1622 = vunpack.c.l.b16 %v1607
        %v1623 = vunpack.c.l.b16 %v1608
        %v1624 = vpack.c.b16 %v1621, %v1620
        %v1625 = vpack.c.b16 %v1623, %v1622
        %v1629 = vsel %vm934, %v1604, 0
        %1631 = vmatprep.subr.bf16.mxu0 0
        %1632 = vmatpush1.bf16.msra.mxu0 %v1624
        %1633 = vmatprep.subr.bf16.mxu0 0
        %1634 = vmatpush1.bf16.msra.mxu0 %v1625
        %1635 = vmatprep.subr.bf16.mxu0 0
        %1636 = vmatpush1.bf16.msra.mxu0 0
        %1637 = vmatprep.subr.bf16.mxu0 0
        %1638 = vmatpush1.bf16.msra.mxu0 0
        %1639 = vmatprep.subr.bf16.mxu0 0
        %1640 = vmatpush1.bf16.msra.mxu0 0
        %1641 = vmatprep.subr.bf16.mxu0 0
        %1642 = vmatpush1.bf16.msra.mxu0 0
        %1643 = vmatprep.subr.bf16.mxu0 0
        %1644 = vmatpush1.bf16.msra.mxu0 0
        %1645 = vmatprep.subr.bf16.mxu0 0
        %1646 = vmatpush1.bf16.msra.mxu0 0
        %1647 = vmatprep.subr.bf16.mxu0 0
        %1648 = vmatpush1.bf16.msra.mxu0 0
        %1649 = vmatprep.subr.bf16.mxu0 0
        %1650 = vmatpush1.bf16.msra.mxu0 0
        %1651 = vmatprep.subr.bf16.mxu0 0
        %1652 = vmatpush1.bf16.msra.mxu0 0
        %1653 = vmatprep.subr.bf16.mxu0 0
        %1654 = vmatpush1.bf16.msra.mxu0 0
        %1655 = vmatprep.subr.bf16.mxu0 0
        %1656 = vmatpush1.bf16.msra.mxu0 0
        %1657 = vmatprep.subr.bf16.mxu0 0
        %1658 = vmatpush1.bf16.msra.mxu0 0
        %1659 = vmatprep.subr.bf16.mxu0 0
        %1660 = vmatpush1.bf16.msra.mxu0 0
        %1661 = vmatprep.subr.bf16.mxu0 0
        %1662 = vmatpush1.bf16.msra.mxu0 0
        %1663 = vmatprep.mubr.bf16.mxu0 0
        %1664 = vmatmul.mubr.bf16.gmra.mrb[0].mxu0 %v1629
        %v1665 = vpop.f32.mrb[0].mxu0
        %v1666 = vadd.f32 %v1614, %v1665
        %v1667 = vpop.f32.mrb[0].mxu0
        %v1668 = vpop.f32.mrb[0].mxu0
        %v1669 = vpop.f32.mrb[0].mxu0
        %1670 = vdwg.mxu0
        %v1671 = vmul.f32 %v1666, 1.702
        %v1672 = vxor.u32 %v1671, 2147483648
        %v1673 = vmul.f32 %v1672, 1.442695
        %v1674 = vpow.pop %v1673
        %v1675 = vadd.f32 %v1674, 1.0
        %v1676 = vrcp.pop %v1675
        %v1677 = vmul.f32 1.0, %v1676
        %v1678 = vmul.f32 %v1666, %v1677
        %v1679 = vpack.c.bf16 %v1678, %v1678
        %v1680 = vld [vmem:[%s817] sm:$0xf]
        %v1681 = vld [vmem:[%s817 + $0x4] sm:$0xf]
        %v1682 = vld [vmem:[%s817 + $0x8] sm:$0xf]
        %v1683 = vld [vmem:[%s817 + $0xc] sm:$0xf]
        %v1684 = vld [vmem:[%s817 + $0x10] sm:$0xf]
        %v1685 = vld [vmem:[%s817 + $0x14] sm:$0xf]
        %v1686 = vld [vmem:[%s817 + $0x18] sm:$0xf]
        %v1687 = vld [vmem:[%s817 + $0x1c] sm:$0xf]
        %v1688 = vld [vmem:[%s817 + $0x20] sm:$0xf]
        %v1689 = vld [vmem:[%s817 + $0x24] sm:$0xf]
        %v1690 = vld [vmem:[%s817 + $0x28] sm:$0xf]
        %v1691 = vld [vmem:[%s817 + $0x2c] sm:$0xf]
        %v1692 = vld [vmem:[%s817 + $0x30] sm:$0xf]
        %v1693 = vld [vmem:[%s817 + $0x34] sm:$0xf]
        %v1694 = vld [vmem:[%s817 + $0x38] sm:$0xf]
        %v1695 = vld [vmem:[%s817 + $0x3c] sm:$0xf]
        %v1712 = vunpack.c.l.b16 %v1680
        %v1713 = vunpack.c.l.b16 %v1681
        %v1714 = vunpack.c.l.b16 %v1682
        %v1715 = vunpack.c.l.b16 %v1683
        %v1716 = vunpack.c.l.b16 %v1684
        %v1717 = vunpack.c.l.b16 %v1685
        %v1718 = vunpack.c.l.b16 %v1686
        %v1719 = vunpack.c.l.b16 %v1687
        %v1720 = vunpack.c.l.b16 %v1688
        %v1721 = vunpack.c.l.b16 %v1689
        %v1722 = vunpack.c.l.b16 %v1690
        %v1723 = vunpack.c.l.b16 %v1691
        %v1724 = vunpack.c.l.b16 %v1692
        %v1725 = vunpack.c.l.b16 %v1693
        %v1726 = vunpack.c.l.b16 %v1694
        %v1727 = vunpack.c.l.b16 %v1695
        %v1728 = vpack.c.b16 %v1713, %v1712
        %v1729 = vpack.c.b16 %v1715, %v1714
        %v1730 = vpack.c.b16 %v1717, %v1716
        %v1731 = vpack.c.b16 %v1719, %v1718
        %v1732 = vpack.c.b16 %v1721, %v1720
        %v1733 = vpack.c.b16 %v1723, %v1722
        %v1734 = vpack.c.b16 %v1725, %v1724
        %v1735 = vpack.c.b16 %v1727, %v1726
        %1744 = vmatprep.subr.bf16.mxu0 0
        %1745 = vmatpush1.bf16.msra.mxu0 %v1728
        %1746 = vmatprep.subr.bf16.mxu0 0
        %1747 = vmatpush1.bf16.msra.mxu0 %v1729
        %1748 = vmatprep.subr.bf16.mxu0 0
        %1749 = vmatpush1.bf16.msra.mxu0 %v1730
        %1750 = vmatprep.subr.bf16.mxu0 0
        %1751 = vmatpush1.bf16.msra.mxu0 %v1731
        %1752 = vmatprep.subr.bf16.mxu0 0
        %1753 = vmatpush1.bf16.msra.mxu0 %v1732
        %1754 = vmatprep.subr.bf16.mxu0 0
        %1755 = vmatpush1.bf16.msra.mxu0 %v1733
        %1756 = vmatprep.subr.bf16.mxu0 0
        %1757 = vmatpush1.bf16.msra.mxu0 %v1734
        %1758 = vmatprep.subr.bf16.mxu0 0
        %1759 = vmatpush1.bf16.msra.mxu0 %v1735
        %1760 = vmatprep.subr.bf16.mxu0 0
        %1761 = vmatpush1.bf16.msra.mxu0 0
        %1762 = vmatprep.subr.bf16.mxu0 0
        %1763 = vmatpush1.bf16.msra.mxu0 0
        %1764 = vmatprep.subr.bf16.mxu0 0
        %1765 = vmatpush1.bf16.msra.mxu0 0
        %1766 = vmatprep.subr.bf16.mxu0 0
        %1767 = vmatpush1.bf16.msra.mxu0 0
        %1768 = vmatprep.subr.bf16.mxu0 0
        %1769 = vmatpush1.bf16.msra.mxu0 0
        %1770 = vmatprep.subr.bf16.mxu0 0
        %1771 = vmatpush1.bf16.msra.mxu0 0
        %1772 = vmatprep.subr.bf16.mxu0 0
        %1773 = vmatpush1.bf16.msra.mxu0 0
        %1774 = vmatprep.subr.bf16.mxu0 0
        %1775 = vmatpush1.bf16.msra.mxu0 0
        %1776 = vmatprep.mubr.bf16.mxu0 0
        %1777 = vmatmul.mubr.bf16.gmra.mrb[0].mxu0 %v1679
        %v1778 = vpop.f32.mrb[0].mxu0
        %v1779 = vadd.f32 0.0, %v1778
        %v1780 = vpop.f32.mrb[0].mxu0
        %v1781 = vpop.f32.mrb[0].mxu0
        %v1782 = vpop.f32.mrb[0].mxu0
        %1783 = vdwg.mxu0
        %v1784 = vadd.f32 %v1567, %v1779
        %v1785 = vld [vmem:[%s825] sm:$0x1]
        %v1787 = vlaneseq
        %v1788 = vshrl.u32 %v1787, 7
        %v1789 = vsub.s32 0, %v1788
        %v1790 = vrot.slane %v1785, %v1789
        %v1792 = vadd.f32 %v1784, %v1790
        %1793 = vst.msk [vmem:[#allocation2] sm:$0xff] %vm934, %v1792
        %p1794 = scmp.eq.s32.totalorder %s55, 1
        // Predicated region
        $region137: #{tpu_custom_call.1} parent=75 // pred_check
          %p1795 = pneg %p1794
        $region138: #{tpu_custom_call.1} parent=75 // pred_check_branch
          %1797 = sbr.rel (%p1795) target = $region140
        $region139: #{tpu_custom_call.1} parent=75 // pred_region
          %1798 = vst.msk [vmem:[%s921] sm:$0xff] %vm934, %v1792
        $region140: #{tpu_custom_call.1} parent=75 // pred_fallthru
          _
        %s1799 = sand.u32 %s429, 1
        %s1800 = scalar_lea.sflag [#allocation5], %s1799
        %s1801 = sand.u32 %s429, 1
        %s1802 = smul.addr %s1801, 8
        %s1803 = scalar_lea.vmem [#allocation26], %s1802
        // Predicated region
        $region141: #{tpu_custom_call.1} parent=75 // pred_check
          %p1804 = pneg %p439
        $region142: #{tpu_custom_call.1} parent=75 // pred_check_branch
          %1806 = sbr.rel (%p1804) target = $region144
        $region143: #{tpu_custom_call.1} parent=75 // pred_region
          %s1808 = ssub.s32 128, 128
          %1809 = vsyncadd %s1800, %s1808
          %s1810 = smul.addr %s54, 128
          %s1811 = scalar_lea.hbm %s14, %s1810
          %s1813 = sshll.u32 %s1803, 4
          %s1814 = int_to_ptr.vmem [resolvable:$true] %s1813
          %1816 = dma.vmem_to_hbm [thread:$0]  %s1814, 128, %s1811, %s1800
        $region144: #{tpu_custom_call.1} parent=75 // pred_fallthru
          _
      $region76: #{tpu_custom_call.1} parent=5 // pred_fallthru
        _
      %p1817 = scmp.le.s32.totalorder 2, %s45
      // Predicated region
      $region145: #{tpu_custom_call.1} parent=5 // pred_check
        %p1818 = pneg %p1817
      $region146: #{tpu_custom_call.1} parent=5 // pred_check_branch
        %1820 = sbr.rel (%p1818) target = $region148
      $region147: #{tpu_custom_call.1} parent=5 // pred_region
        %s1821 = ssub.s32 %s45, 2
        // Predicated region
        $region149: #{tpu_custom_call.1} parent=147 // pred_check
          %p1822 = pneg %p445
        $region150: #{tpu_custom_call.1} parent=147 // pred_check_branch
          %1824 = sbr.rel (%p1822) target = $region152
        $region151: #{tpu_custom_call.1} parent=147 // pred_region
          %s1825 = sand.u32 %s430, 1
          %s1826 = scalar_lea.sflag [#allocation5], %s1825
          %s1827 = sand.u32 %s430, 1
          %s1828 = smul.addr %s1827, 8
          %s1829 = scalar_lea.vmem [#allocation26], %s1828
          %1830 = dma.done %s1826, 128
        $region152: #{tpu_custom_call.1} parent=147 // pred_fallthru
          _
      $region148: #{tpu_custom_call.1} parent=5 // pred_fallthru
        _
    $region6: #{tpu_custom_call.1} parent=1 // loop_footer
      %s49 = sadd.s32 1, %s45
    $region7: #{tpu_custom_call.1} parent=1 // loop_footer_branch
      %44 = sbr.rel target = $region3
    $region8: #{tpu_custom_call.1} parent=1 // loop_exit
      _
    %1831 = vsyncpa [#allocation4], 1
    %s1832 = scalar_lea.sflag [#allocation4], 1
    %1833 = vsyncpa %s1832, 1
    %1834 = vsyncpa [#allocation7], 1
    %s1835 = scalar_lea.sflag [#allocation7], 1
    %1836 = vsyncpa %s1835, 1
    %1837 = vsyncpa [#allocation10], 1
    %s1838 = scalar_lea.sflag [#allocation10], 1
    %1839 = vsyncpa %s1838, 1
    %1840 = vsyncpa [#allocation13], 1
    %s1841 = scalar_lea.sflag [#allocation13], 1
    %1842 = vsyncpa %s1841, 1
    %1843 = vsyncpa [#allocation16], 1
    %s1844 = scalar_lea.sflag [#allocation16], 1
    %1845 = vsyncpa %s1844, 1
    %1846 = vsyncpa [#allocation19], 1
    %s1847 = scalar_lea.sflag [#allocation19], 1
    %1848 = vsyncpa %s1847, 1
    %1849 = vsyncpa [#allocation22], 1
    %s1850 = scalar_lea.sflag [#allocation22], 1
    %1851 = vsyncpa %s1850, 1
    %1852 = vsyncpa [#allocation25], 1
    %s1853 = scalar_lea.sflag [#allocation25], 1
    %1854 = vsyncpa %s1853, 1
    %1855 = vsyncpa [#allocation5], 1
    %s1856 = scalar_lea.sflag [#allocation5], 1
    %1857 = vsyncpa %s1856, 1

</llo_original>
